<compile_context>
chip_gen: v7x
topology: tpu7x:2x2x1
jax: 0.10.0
libtpu: 0.0.40
codegen_flags: <defaults>
</compile_context>

<pallas_src>
import functools
import numpy as np
import jax
import jax.numpy as jnp
from jax import lax
from jax.experimental import pallas as pl
from jax.experimental.pallas import tpu as pltpu


# ---------------------------------------------------------------------------
# Static layout of the packed parameter slabs
# ---------------------------------------------------------------------------
def _round8(n):
    return ((n + 7) // 8) * 8


_ROW_IDX = {name: i for i, name in enumerate([
    "asrc_r", "bns_r", "biasf_r", "g2b1_r", "g2b2_r", "g3b1_r", "g3b2_r",
    "asrc_p", "bns_p", "biasf_p", "g2b1_p", "g2b2_p", "g3b1_p", "g3b2_p",
    "hb1", "hb2", "hbc"])}


def _mats_layout(in_r, in_p, h1_r, h2_r, h1_p, h2_p):
    """Row offsets (8-aligned) of every matrix inside the single bf16 slab."""
    layout = {}
    off = 0

    def add(name, r, c):
        nonlocal off
        layout[name] = (off, r, c)
        off += _round8(r)

    add("wgbd", in_r + in_p, (h1_r + 1) + (h1_p + 1))   # blockdiag([Wr|Wr a_dst_r], [Wp|Wp a_dst_p])
    add("g2w1_r", h1_r, h2_r)
    add("g2w2_r", h2_r, h2_r)
    add("g3w1_r", h2_r, h2_r)
    add("g3w2_r", h2_r, h2_r)
    add("g2w1_p", h1_p, h2_p)
    add("g2w2_p", h2_p, h2_p)
    add("g3w1_p", h2_p, h2_p)
    add("g3w2_p", h2_p, h2_p)
    add("hw1_r", h1_r + 2 * h2_r, 32)
    add("hw1_p", h1_p + 2 * h2_p, 32)
    add("hw2", 32, 24)
    add("hwc", 24, 128)                                  # classify W padded to 128 lanes
    return layout, off


# ---------------------------------------------------------------------------
# Fused kernel: both branches (GAT -> BN+ReLU -> GIN -> GIN) + pool + head
# One grid step = one graph-batch.
# ---------------------------------------------------------------------------
def _multignn_kernel(dims, layout,
                     x_ref, ar_ref, ap_ref, p_ref, rows_ref, mats_ref, out_ref):
    in_r, in_p, h1_r, h2_r, h1_p, h2_p = dims

    # bf16 storage -> f32 compute (all elementwise math stays f32; v5e-safe)
    x = x_ref[...].astype(jnp.float32)        # [N, in_r+in_p]
    A_r = ar_ref[...].astype(jnp.float32)     # [N, N]
    A_p = ap_ref[...].astype(jnp.float32)     # [N, N]
    P = p_ref[...].astype(jnp.float32)        # [G, N]

    def mat(name):                            # static slab slice (zero runtime cost)
        o, r, c = layout[name]
        return mats_ref[o:o + r, 0:c].astype(jnp.float32)

    def row(name, w):
        i = _ROW_IDX[name]
        return rows_ref[i:i + 1, 0:w]          # [1, w] f32

    # ---- both GAT projections (+ folded a_dst column) in ONE block-diag matmul ----
    h_all = jnp.dot(x, mat("wgbd"), preferred_element_type=jnp.float32)  # [N, h1_r+1+h1_p+1]
    h_r = h_all[:, 0:h1_r]
    dst_r = h_all[:, h1_r:h1_r + 1]
    op = h1_r + 1
    h_p = h_all[:, op:op + h1_p]
    dst_p = h_all[:, op + h1_p:op + h1_p + 1]

    def branch(h, dst, A, tag, h1, h2):
        # --- GATConv attention (single head, no self loops), BN folded post-matmul ---
        src = lax.dot_general(row("asrc_" + tag, h1), h, (((1,), (1,)), ((), ())),
                              preferred_element_type=jnp.float32)          # [1, N] (MXU)
        e = dst + src                                                       # [N, N]
        e = jnp.where(e > 0, e, 0.2 * e)                                    # LeakyReLU(0.2)
        mask = A > 0
        e_m = jnp.where(mask, e, -1e30)
        m = jnp.max(e_m, axis=1, keepdims=True)
        # exponent clamped <= 0 so no inf appears, even on discarded lanes
        pcoef = jnp.where(mask, jnp.exp(jnp.minimum(e_m - m, 0.0)), 0.0)
        denom = jnp.sum(pcoef, axis=1, keepdims=True)
        num = jnp.dot(pcoef, h, preferred_element_type=jnp.float32)         # unnormalized
        inv = pl.reciprocal(jnp.maximum(denom, 1e-16), approx=True)         # EUP, ~free
        g1 = jnp.maximum((num * inv) * row("bns_" + tag, h1)
                         + row("biasf_" + tag, h1), 0.0)                    # [N, h1]

        # --- GINConv (eps=0), BN folded into lin1/lin2: nn(x_i + sum_{j->i} x_j) ---
        def gin(xin, i):
            agg = xin + jnp.dot(A, xin, preferred_element_type=jnp.float32)
            y = jnp.dot(agg, mat("g%dw1_%s" % (i, tag)),
                        preferred_element_type=jnp.float32)
            y = jnp.maximum(y + row("g%db1_%s" % (i, tag), h2), 0.0)
            y = jnp.dot(y, mat("g%dw2_%s" % (i, tag)),
                        preferred_element_type=jnp.float32)
            return jnp.maximum(y + row("g%db2_%s" % (i, tag), h2), 0.0)

        g2 = gin(g1, 2)
        g3 = gin(g2, 3)
        return jnp.concatenate([g1, g2, g3], axis=1)                        # [N, h1+2*h2]

    slab_r = branch(h_r, dst_r, A_r, "r", h1_r, h2_r)
    slab_p = branch(h_p, dst_p, A_p, "p", h1_p, h2_p)

    # concat + global_add_pool + fc1 via associativity, one dot per branch:
    #   (P @ [slab_r | slab_p]) @ W1  ==  P @ (slab_r @ W1_r + slab_p @ W1_p)
    z = (jnp.dot(slab_r, mat("hw1_r"), preferred_element_type=jnp.float32)
         + jnp.dot(slab_p, mat("hw1_p"), preferred_element_type=jnp.float32))  # [N, 32]
    y = jnp.dot(P, z, preferred_element_type=jnp.float32) + row("hb1", 32)     # [G, 32]
    y = jnp.dot(y, mat("hw2"), preferred_element_type=jnp.float32) + row("hb2", 24)
    y = jnp.maximum(y, 0.0)                                                    # F.relu(fc(conv))
    # classify, written lane-dense (128 wide, zero-padded beyond n_classes)
    out_ref[...] = (jnp.dot(y, mat("hwc"), preferred_element_type=jnp.float32)
                    + row("hbc", 128))                                          # [G, 128]


def multignn_fused(x_cat, A_r, A_p, P, rows, mats, *, dims, layout, n_classes):
    B, N, f_in = x_cat.shape
    G = P.shape[1]
    kernel = functools.partial(_multignn_kernel, dims, layout)
    out = pl.pallas_call(
        kernel,
        grid=(B,),
        in_specs=[
            pl.BlockSpec((None, N, f_in), lambda b: (b, 0, 0)),   # x  (per-batch tile)
            pl.BlockSpec((None, N, N), lambda b: (b, 0, 0)),      # A_r
            pl.BlockSpec((None, N, N), lambda b: (b, 0, 0)),      # A_p
            pl.BlockSpec((None, G, N), lambda b: (b, 0, 0)),      # P
            pl.BlockSpec(rows.shape, lambda b: (0, 0)),           # resident across grid
            pl.BlockSpec(mats.shape, lambda b: (0, 0)),           # resident across grid
        ],
        out_specs=pl.BlockSpec((None, G, 128), lambda b: (b, 0, 0)),
        out_shape=jax.ShapeDtypeStruct((B, G, 128), jnp.float32),
        compiler_params=pltpu.CompilerParams(
            dimension_semantics=("parallel",)),                   # 2 TCs on v7x
    )(x_cat, A_r, A_p, P, rows, mats)
    return out[:, :, :n_classes]


# ---------------------------------------------------------------------------
# Deterministic synthetic parameter construction (same model as before)
# ---------------------------------------------------------------------------
def _lin(key, fin, fout, scale=0.2):
    kw, kb = jax.random.split(key)
    w = jax.random.normal(kw, (fin, fout), jnp.float32) * scale
    b = jax.random.normal(kb, (1, fout), jnp.float32) * 0.1
    return w, b


def _bn(key, f):
    kg, kb, km = jax.random.split(key, 3)
    gamma = 1.0 + 0.1 * jax.random.normal(kg, (1, f), jnp.float32)
    beta = 0.1 * jax.random.normal(kb, (1, f), jnp.float32)
    mean = 0.05 * jax.random.normal(km, (1, f), jnp.float32)
    var = jnp.ones((1, f), jnp.float32)
    scale = gamma / jnp.sqrt(var + 1e-5)
    shift = beta - mean * scale
    return scale, shift


def make_branch_params(key, in_dim, h1, h2):
    ks = jax.random.split(key, 16)
    gat_w, _ = _lin(ks[0], in_dim, h1)
    gat_asrc = 0.2 * jax.random.normal(ks[1], (1, h1), jnp.float32)
    gat_adst = 0.2 * jax.random.normal(ks[2], (1, h1), jnp.float32)
    gat_b = 0.1 * jax.random.normal(ks[3], (1, h1), jnp.float32)
    bn_s, bn_t = _bn(ks[4], h1)

    def gin_params(k4, fin, fout):
        w1, b1 = _lin(k4[0], fin, fout)
        s1, t1 = _bn(k4[1], fout)
        w2, b2 = _lin(k4[2], fout, fout)
        s2, t2 = _bn(k4[3], fout)
        return (w1, b1, s1, t1, w2, b2, s2, t2)

    gin2 = gin_params(ks[5:9], h1, h2)
    gin3 = gin_params(ks[9:13], h2, h2)
    return dict(gat_w=gat_w, gat_asrc=gat_asrc, gat_adst=gat_adst, gat_b=gat_b,
                bn_s=bn_s, bn_t=bn_t, gin2=gin2, gin3=gin3)


def make_head_params(key, d_in, n_classes):
    k1, k2, k3 = jax.random.split(key, 3)
    w1, b1 = _lin(k1, d_in, 32)
    w2, b2 = _lin(k2, 32, 24)
    wc, bc = _lin(k3, 24, n_classes)
    return dict(w1=w1, b1=b1, w2=w2, b2=b2, wc=wc, bc=bc)


# ---------------------------------------------------------------------------
# Host-side folding + packing into two slabs (done ONCE, off the serving path)
# ---------------------------------------------------------------------------
def pack_params(params_r, params_p, head_params, in_r, in_p,
                h1_r, h2_r, h1_p, h2_p, n_classes, row_width=128):
    layout, total_rows = _mats_layout(in_r, in_p, h1_r, h2_r, h1_p, h2_p)
    mats = np.zeros((total_rows, row_width), np.float32)
    rows = np.zeros((len(_ROW_IDX), row_width), np.float32)

    def put_mat(name, w):
        o = layout[name][0]
        w = np.asarray(w, np.float32)
        mats[o:o + w.shape[0], :w.shape[1]] = w

    def put_row(name, v):
        v = np.asarray(v, np.float32).reshape(-1)
        rows[_ROW_IDX[name], :v.shape[0]] = v

    def fold_gin(gin):
        w1, b1, s1, t1, w2, b2, s2, t2 = (np.asarray(a, np.float32) for a in gin)
        return w1 * s1, b1 * s1 + t1, w2 * s2, b2 * s2 + t2

    def fold_branch(p, tag):
        wg = np.asarray(p["gat_w"], np.float32)
        adst = np.asarray(p["gat_adst"], np.float32)
        bn_s = np.asarray(p["bn_s"], np.float32)
        bn_t = np.asarray(p["bn_t"], np.float32)
        gat_b = np.asarray(p["gat_b"], np.float32)
        put_row("asrc_" + tag, p["gat_asrc"])
        put_row("bns_" + tag, bn_s)
        put_row("biasf_" + tag, gat_b * bn_s + bn_t)     # BN(gat bias) folded
        for i, gin in ((2, p["gin2"]), (3, p["gin3"])):
            w1f, b1f, w2f, b2f = fold_gin(gin)
            put_mat("g%dw1_%s" % (i, tag), w1f)
            put_row("g%db1_%s" % (i, tag), b1f)
            put_mat("g%dw2_%s" % (i, tag), w2f)
            put_row("g%db2_%s" % (i, tag), b2f)
        return np.concatenate([wg, wg @ adst.T], axis=1)  # [in, h1+1], a_dst folded in

    wg_aug_r = fold_branch(params_r, "r")
    wg_aug_p = fold_branch(params_p, "p")
    wgbd = np.zeros((in_r + in_p, (h1_r + 1) + (h1_p + 1)), np.float32)
    wgbd[:in_r, :h1_r + 1] = wg_aug_r
    wgbd[in_r:, h1_r + 1:] = wg_aug_p
    put_mat("wgbd", wgbd)

    # head: fc1 split to match [slab_r | slab_p]; classify padded to 128 lanes
    w1 = np.asarray(head_params["w1"], np.float32)
    d_r = h1_r + 2 * h2_r
    put_mat("hw1_r", w1[:d_r])
    put_mat("hw1_p", w1[d_r:])
    put_mat("hw2", np.asarray(head_params["w2"], np.float32))
    wc_pad = np.zeros((24, row_width), np.float32)
    wc_pad[:, :n_classes] = np.asarray(head_params["wc"], np.float32)
    put_mat("hwc", wc_pad)
    put_row("hb1", head_params["b1"])
    put_row("hb2", head_params["b2"])
    put_row("hbc", head_params["bc"])

    return (jnp.asarray(rows, jnp.float32),
            jnp.asarray(mats, jnp.bfloat16),
            layout)


# ---------------------------------------------------------------------------
# Glue: edge list -> dense adjacency, batch -> pooling matrix (precomputed once)
# ---------------------------------------------------------------------------
def dense_adj(edge_index, n):
    src, dst = edge_index[0], edge_index[1]
    return jnp.zeros((n, n), jnp.float32).at[dst, src].set(1.0)


def pool_matrix(batch, num_graphs):
    return (batch[None, :] == jnp.arange(num_graphs)[:, None]).astype(jnp.float32)


if __name__ == "__main__":
    # ---- small deterministic problem ----
    in_dim_r, h1_r, h2_r = 6, 16, 16
    in_dim_p, h1_p, h2_p = 5, 8, 8
    n_classes = 3
    N = 12          # nodes per graph-batch (shared `batch` => same nodes both modalities)
    G = 2           # graphs per graph-batch
    B = 8           # graph-batches processed behind one pipelined grid

    key = jax.random.PRNGKey(0)
    k_xr, k_xp, k_pr, k_pp, k_h = jax.random.split(key, 5)

    x_r = jax.random.normal(k_xr, (B, N, in_dim_r), jnp.float32)
    x_p = jax.random.normal(k_xp, (B, N, in_dim_p), jnp.float32)

    # two graphs of 6 nodes each: bidirectional ring + chord (radiology),
    # directed ring + chords (pathology); same topology replicated across B batches
    edges_r, edges_p = [], []
    for base in (0, 6):
        for i in range(6):
            edges_r.append((base + i, base + (i + 1) % 6))
            edges_r.append((base + (i + 1) % 6, base + i))
            edges_p.append((base + i, base + (i + 2) % 6))
        edges_r.append((base, base + 3))
        edges_r.append((base + 3, base))
        edges_p.append((base + 1, base + 4))
        edges_p.append((base + 4, base + 1))
    edge_r = jnp.array(edges_r, dtype=jnp.int32).T
    edge_p = jnp.array(edges_p, dtype=jnp.int32).T
    batch = jnp.array([0] * 6 + [1] * 6, dtype=jnp.int32)

    params_r = make_branch_params(k_pr, in_dim_r, h1_r, h2_r)
    params_p = make_branch_params(k_pp, in_dim_p, h1_p, h2_p)
    d_total = h1_r + 2 * h2_r + h1_p + 2 * h2_p
    head_params = make_head_params(k_h, d_total, n_classes)

    # ---- host-side prep: done ONCE, outside the serving path ----
    rows, mats, layout = pack_params(params_r, params_p, head_params,
                                     in_dim_r, in_dim_p,
                                     h1_r, h2_r, h1_p, h2_p, n_classes)
    A_r = jnp.tile(dense_adj(edge_r, N)[None], (B, 1, 1)).astype(jnp.bfloat16)
    A_p = jnp.tile(dense_adj(edge_p, N)[None], (B, 1, 1)).astype(jnp.bfloat16)
    P = jnp.tile(pool_matrix(batch, G)[None], (B, 1, 1)).astype(jnp.bfloat16)
    x_cat = jnp.concatenate([x_r, x_p], axis=-1).astype(jnp.bfloat16)

    dims = (in_dim_r, in_dim_p, h1_r, h2_r, h1_p, h2_p)
    fwd = jax.jit(functools.partial(multignn_fused, dims=dims, layout=layout,
                                    n_classes=n_classes))
    out = fwd(x_cat, A_r, A_p, P, rows, mats)
    jax.block_until_ready(out)

    assert out.shape == (B, G, n_classes)
    assert bool(jnp.all(jnp.isfinite(out)))
    print("KERNEL_OK")
</pallas_src>

<mosaic_0001>
module attributes {stable_mosaic.version = 11 : i64} {
  func.func @_multignn_kernel(%arg0: i32, %arg1: memref<1x12x11xbf16, #tpu.memory_space<vmem>>, %arg2: memref<1x12x12xbf16, #tpu.memory_space<vmem>>, %arg3: memref<1x12x12xbf16, #tpu.memory_space<vmem>>, %arg4: memref<1x2x12xbf16, #tpu.memory_space<vmem>>, %arg5: memref<17x128xf32, #tpu.memory_space<vmem>>, %arg6: memref<240x128xbf16, #tpu.memory_space<vmem>>, %arg7: memref<1x2x128xf32, #tpu.memory_space<vmem>>) attributes {dimension_semantics = [#tpu.dimension_semantics<parallel>], iteration_bounds = array<i64: 8>, scalar_prefetch = 0 : i64, scratch_operands = 0 : i64, tpu.core_type = #tpu.core_type<tc>, window_params = [{transform_indices = @transform_0, window_bounds = array<i64: 1, 12, 11>}, {transform_indices = @transform_1, window_bounds = array<i64: 1, 12, 12>}, {transform_indices = @transform_2, window_bounds = array<i64: 1, 12, 12>}, {transform_indices = @transform_3, window_bounds = array<i64: 1, 2, 12>}, {pipeline_mode = #tpu.pipeline_mode<synchronous>, transform_indices = @transform_4, window_bounds = array<i64: 17, 128>}, {pipeline_mode = #tpu.pipeline_mode<synchronous>, transform_indices = @transform_5, window_bounds = array<i64: 240, 128>}, {transform_indices = @transform_6, window_bounds = array<i64: 1, 2, 128>}]} {
    %c0 = arith.constant 0 : index
    %c0_0 = arith.constant 0 : index
    %c0_1 = arith.constant 0 : index
    %0 = vector.load %arg1[%c0, %c0_0, %c0_1] : memref<1x12x11xbf16, #tpu.memory_space<vmem>>, vector<1x12x11xbf16>
    %1 = vector.shape_cast %0 : vector<1x12x11xbf16> to vector<12x11xbf16>
    %2 = arith.extf %1 : vector<12x11xbf16> to vector<12x11xf32>
    %c0_2 = arith.constant 0 : index
    %c0_3 = arith.constant 0 : index
    %c0_4 = arith.constant 0 : index
    %3 = vector.load %arg2[%c0_2, %c0_3, %c0_4] : memref<1x12x12xbf16, #tpu.memory_space<vmem>>, vector<1x12x12xbf16>
    %4 = vector.shape_cast %3 : vector<1x12x12xbf16> to vector<12x12xbf16>
    %5 = arith.extf %4 : vector<12x12xbf16> to vector<12x12xf32>
    %c0_5 = arith.constant 0 : index
    %c0_6 = arith.constant 0 : index
    %c0_7 = arith.constant 0 : index
    %6 = vector.load %arg3[%c0_5, %c0_6, %c0_7] : memref<1x12x12xbf16, #tpu.memory_space<vmem>>, vector<1x12x12xbf16>
    %7 = vector.shape_cast %6 : vector<1x12x12xbf16> to vector<12x12xbf16>
    %8 = arith.extf %7 : vector<12x12xbf16> to vector<12x12xf32>
    %c0_8 = arith.constant 0 : index
    %c0_9 = arith.constant 0 : index
    %c0_10 = arith.constant 0 : index
    %9 = vector.load %arg4[%c0_8, %c0_9, %c0_10] : memref<1x2x12xbf16, #tpu.memory_space<vmem>>, vector<1x2x12xbf16>
    %10 = vector.shape_cast %9 : vector<1x2x12xbf16> to vector<2x12xbf16>
    %11 = arith.extf %10 : vector<2x12xbf16> to vector<2x12xf32>
    %c0_11 = arith.constant 0 : index
    %c0_12 = arith.constant 0 : index
    %12 = vector.load %arg6[%c0_11, %c0_12] : memref<240x128xbf16, #tpu.memory_space<vmem>>, vector<11x26xbf16>
    %13 = arith.extf %12 : vector<11x26xbf16> to vector<11x26xf32>
    %cst = arith.constant dense<0.000000e+00> : vector<12x26xf32>
    %14 = tpu.matmul %2, %13, %cst {dimension_numbers = #tpu.dot_dimension_numbers<[1], [0], [0], [1], [0, 0, 1, 1], [], []>} : vector<12x11xf32>, vector<11x26xf32>, vector<12x26xf32> -> vector<12x26xf32>
    %15 = vector.extract_strided_slice %14 {offsets = [0, 0], sizes = [12, 16], strides = [1, 1]} : vector<12x26xf32> to vector<12x16xf32>
    %16 = vector.extract_strided_slice %14 {offsets = [0, 16], sizes = [12, 1], strides = [1, 1]} : vector<12x26xf32> to vector<12x1xf32>
    %17 = vector.extract_strided_slice %14 {offsets = [0, 17], sizes = [12, 8], strides = [1, 1]} : vector<12x26xf32> to vector<12x8xf32>
    %18 = vector.extract_strided_slice %14 {offsets = [0, 25], sizes = [12, 1], strides = [1, 1]} : vector<12x26xf32> to vector<12x1xf32>
    %c0_13 = arith.constant 0 : index
    %c0_14 = arith.constant 0 : index
    %19 = vector.load %arg5[%c0_13, %c0_14] : memref<17x128xf32, #tpu.memory_space<vmem>>, vector<1x16xf32>
    %cst_15 = arith.constant dense<0.000000e+00> : vector<1x12xf32>
    %20 = tpu.matmul %19, %15, %cst_15 {dimension_numbers = #tpu.dot_dimension_numbers<[1], [1], [0], [0], [0, 0, 1, 0], [], []>} : vector<1x16xf32>, vector<12x16xf32>, vector<1x12xf32> -> vector<1x12xf32>
    %21 = vector.broadcast %16 : vector<12x1xf32> to vector<12x12xf32>
    %22 = vector.broadcast %20 : vector<1x12xf32> to vector<12x12xf32>
    %23 = arith.addf %21, %22 : vector<12x12xf32>
    %cst_16 = arith.constant 0.000000e+00 : f32
    %24 = vector.broadcast %cst_16 : f32 to vector<12x12xf32>
    %25 = arith.cmpf ogt, %23, %24 : vector<12x12xf32>
    %cst_17 = arith.constant 2.000000e-01 : f32
    %26 = vector.broadcast %cst_17 : f32 to vector<12x12xf32>
    %27 = arith.mulf %26, %23 : vector<12x12xf32>
    %28 = arith.select %25, %23, %27 : vector<12x12xi1>, vector<12x12xf32>
    %cst_18 = arith.constant 0.000000e+00 : f32
    %29 = vector.broadcast %cst_18 : f32 to vector<12x12xf32>
    %30 = arith.cmpf ogt, %5, %29 : vector<12x12xf32>
    %cst_19 = arith.constant -1.000000e+30 : f32
    %31 = vector.broadcast %cst_19 : f32 to vector<12x12xf32>
    %32 = arith.select %30, %28, %31 : vector<12x12xi1>, vector<12x12xf32>
    %cst_20 = arith.constant dense<0xFF800000> : vector<12xf32>
    %33 = vector.multi_reduction <maximumf>, %32, %cst_20 [1] : vector<12x12xf32> to vector<12xf32>
    %34 = vector.shape_cast %33 : vector<12xf32> to vector<12x1xf32>
    %35 = vector.broadcast %34 : vector<12x1xf32> to vector<12x12xf32>
    %36 = arith.subf %32, %35 : vector<12x12xf32>
    %cst_21 = arith.constant 0.000000e+00 : f32
    %37 = vector.broadcast %cst_21 : f32 to vector<12x12xf32>
    %38 = arith.minimumf %36, %37 : vector<12x12xf32>
    %39 = math.exp %38 : vector<12x12xf32>
    %cst_22 = arith.constant 0.000000e+00 : f32
    %40 = vector.broadcast %cst_22 : f32 to vector<12x12xf32>
    %41 = arith.select %30, %39, %40 : vector<12x12xi1>, vector<12x12xf32>
    %cst_23 = arith.constant dense<0.000000e+00> : vector<12xf32>
    %42 = vector.multi_reduction <add>, %41, %cst_23 [1] : vector<12x12xf32> to vector<12xf32>
    %43 = vector.shape_cast %42 : vector<12xf32> to vector<12x1xf32>
    %cst_24 = arith.constant dense<0.000000e+00> : vector<12x16xf32>
    %44 = tpu.matmul %41, %15, %cst_24 {dimension_numbers = #tpu.dot_dimension_numbers<[1], [0], [0], [1], [0, 0, 1, 1], [], []>} : vector<12x12xf32>, vector<12x16xf32>, vector<12x16xf32> -> vector<12x16xf32>
    %cst_25 = arith.constant 1.000000e-16 : f32
    %45 = vector.broadcast %cst_25 : f32 to vector<12x1xf32>
    %46 = arith.maximumf %43, %45 : vector<12x1xf32>
    %47 = tpu.reciprocal %46 {approx = true} : vector<12x1xf32> -> vector<12x1xf32>
    %48 = vector.broadcast %47 : vector<12x1xf32> to vector<12x16xf32>
    %49 = arith.mulf %44, %48 : vector<12x16xf32>
    %c1 = arith.constant 1 : index
    %c0_26 = arith.constant 0 : index
    %50 = vector.load %arg5[%c1, %c0_26] : memref<17x128xf32, #tpu.memory_space<vmem>>, vector<1x16xf32>
    %51 = vector.broadcast %50 : vector<1x16xf32> to vector<12x16xf32>
    %52 = arith.mulf %49, %51 : vector<12x16xf32>
    %c2 = arith.constant 2 : index
    %c0_27 = arith.constant 0 : index
    %53 = vector.load %arg5[%c2, %c0_27] : memref<17x128xf32, #tpu.memory_space<vmem>>, vector<1x16xf32>
    %54 = vector.broadcast %53 : vector<1x16xf32> to vector<12x16xf32>
    %55 = arith.addf %52, %54 : vector<12x16xf32>
    %cst_28 = arith.constant 0.000000e+00 : f32
    %56 = vector.broadcast %cst_28 : f32 to vector<12x16xf32>
    %57 = arith.maximumf %55, %56 : vector<12x16xf32>
    %cst_29 = arith.constant dense<0.000000e+00> : vector<12x16xf32>
    %58 = tpu.matmul %5, %57, %cst_29 {dimension_numbers = #tpu.dot_dimension_numbers<[1], [0], [0], [1], [0, 0, 1, 1], [], []>} : vector<12x12xf32>, vector<12x16xf32>, vector<12x16xf32> -> vector<12x16xf32>
    %59 = arith.addf %57, %58 : vector<12x16xf32>
    %c16 = arith.constant 16 : index
    %c0_30 = arith.constant 0 : index
    %60 = vector.load %arg6[%c16, %c0_30] : memref<240x128xbf16, #tpu.memory_space<vmem>>, vector<16x16xbf16>
    %61 = arith.extf %60 : vector<16x16xbf16> to vector<16x16xf32>
    %cst_31 = arith.constant dense<0.000000e+00> : vector<12x16xf32>
    %62 = tpu.matmul %59, %61, %cst_31 {dimension_numbers = #tpu.dot_dimension_numbers<[1], [0], [0], [1], [0, 0, 1, 1], [], []>} : vector<12x16xf32>, vector<16x16xf32>, vector<12x16xf32> -> vector<12x16xf32>
    %c3 = arith.constant 3 : index
    %c0_32 = arith.constant 0 : index
    %63 = vector.load %arg5[%c3, %c0_32] : memref<17x128xf32, #tpu.memory_space<vmem>>, vector<1x16xf32>
    %64 = vector.broadcast %63 : vector<1x16xf32> to vector<12x16xf32>
    %65 = arith.addf %62, %64 : vector<12x16xf32>
    %cst_33 = arith.constant 0.000000e+00 : f32
    %66 = vector.broadcast %cst_33 : f32 to vector<12x16xf32>
    %67 = arith.maximumf %65, %66 : vector<12x16xf32>
    %c32 = arith.constant 32 : index
    %c0_34 = arith.constant 0 : index
    %68 = vector.load %arg6[%c32, %c0_34] : memref<240x128xbf16, #tpu.memory_space<vmem>>, vector<16x16xbf16>
    %69 = arith.extf %68 : vector<16x16xbf16> to vector<16x16xf32>
    %cst_35 = arith.constant dense<0.000000e+00> : vector<12x16xf32>
    %70 = tpu.matmul %67, %69, %cst_35 {dimension_numbers = #tpu.dot_dimension_numbers<[1], [0], [0], [1], [0, 0, 1, 1], [], []>} : vector<12x16xf32>, vector<16x16xf32>, vector<12x16xf32> -> vector<12x16xf32>
    %c4 = arith.constant 4 : index
    %c0_36 = arith.constant 0 : index
    %71 = vector.load %arg5[%c4, %c0_36] : memref<17x128xf32, #tpu.memory_space<vmem>>, vector<1x16xf32>
    %72 = vector.broadcast %71 : vector<1x16xf32> to vector<12x16xf32>
    %73 = arith.addf %70, %72 : vector<12x16xf32>
    %cst_37 = arith.constant 0.000000e+00 : f32
    %74 = vector.broadcast %cst_37 : f32 to vector<12x16xf32>
    %75 = arith.maximumf %73, %74 : vector<12x16xf32>
    %cst_38 = arith.constant dense<0.000000e+00> : vector<12x16xf32>
    %76 = tpu.matmul %5, %75, %cst_38 {dimension_numbers = #tpu.dot_dimension_numbers<[1], [0], [0], [1], [0, 0, 1, 1], [], []>} : vector<12x12xf32>, vector<12x16xf32>, vector<12x16xf32> -> vector<12x16xf32>
    %77 = arith.addf %75, %76 : vector<12x16xf32>
    %c48 = arith.constant 48 : index
    %c0_39 = arith.constant 0 : index
    %78 = vector.load %arg6[%c48, %c0_39] : memref<240x128xbf16, #tpu.memory_space<vmem>>, vector<16x16xbf16>
    %79 = arith.extf %78 : vector<16x16xbf16> to vector<16x16xf32>
    %cst_40 = arith.constant dense<0.000000e+00> : vector<12x16xf32>
    %80 = tpu.matmul %77, %79, %cst_40 {dimension_numbers = #tpu.dot_dimension_numbers<[1], [0], [0], [1], [0, 0, 1, 1], [], []>} : vector<12x16xf32>, vector<16x16xf32>, vector<12x16xf32> -> vector<12x16xf32>
    %c5 = arith.constant 5 : index
    %c0_41 = arith.constant 0 : index
    %81 = vector.load %arg5[%c5, %c0_41] : memref<17x128xf32, #tpu.memory_space<vmem>>, vector<1x16xf32>
    %82 = vector.broadcast %81 : vector<1x16xf32> to vector<12x16xf32>
    %83 = arith.addf %80, %82 : vector<12x16xf32>
    %cst_42 = arith.constant 0.000000e+00 : f32
    %84 = vector.broadcast %cst_42 : f32 to vector<12x16xf32>
    %85 = arith.maximumf %83, %84 : vector<12x16xf32>
    %c64 = arith.constant 64 : index
    %c0_43 = arith.constant 0 : index
    %86 = vector.load %arg6[%c64, %c0_43] : memref<240x128xbf16, #tpu.memory_space<vmem>>, vector<16x16xbf16>
    %87 = arith.extf %86 : vector<16x16xbf16> to vector<16x16xf32>
    %cst_44 = arith.constant dense<0.000000e+00> : vector<12x16xf32>
    %88 = tpu.matmul %85, %87, %cst_44 {dimension_numbers = #tpu.dot_dimension_numbers<[1], [0], [0], [1], [0, 0, 1, 1], [], []>} : vector<12x16xf32>, vector<16x16xf32>, vector<12x16xf32> -> vector<12x16xf32>
    %c6 = arith.constant 6 : index
    %c0_45 = arith.constant 0 : index
    %89 = vector.load %arg5[%c6, %c0_45] : memref<17x128xf32, #tpu.memory_space<vmem>>, vector<1x16xf32>
    %90 = vector.broadcast %89 : vector<1x16xf32> to vector<12x16xf32>
    %91 = arith.addf %88, %90 : vector<12x16xf32>
    %cst_46 = arith.constant 0.000000e+00 : f32
    %92 = vector.broadcast %cst_46 : f32 to vector<12x16xf32>
    %93 = arith.maximumf %91, %92 : vector<12x16xf32>
    %94 = tpu.concatenate %57, %75, %93 in 1 : vector<12x16xf32>, vector<12x16xf32>, vector<12x16xf32> -> vector<12x48xf32>
    %c7 = arith.constant 7 : index
    %c0_47 = arith.constant 0 : index
    %95 = vector.load %arg5[%c7, %c0_47] : memref<17x128xf32, #tpu.memory_space<vmem>>, vector<1x8xf32>
    %cst_48 = arith.constant dense<0.000000e+00> : vector<1x12xf32>
    %96 = tpu.matmul %95, %17, %cst_48 {dimension_numbers = #tpu.dot_dimension_numbers<[1], [1], [0], [0], [0, 0, 1, 0], [], []>} : vector<1x8xf32>, vector<12x8xf32>, vector<1x12xf32> -> vector<1x12xf32>
    %97 = vector.broadcast %18 : vector<12x1xf32> to vector<12x12xf32>
    %98 = vector.broadcast %96 : vector<1x12xf32> to vector<12x12xf32>
    %99 = arith.addf %97, %98 : vector<12x12xf32>
    %cst_49 = arith.constant 0.000000e+00 : f32
    %100 = vector.broadcast %cst_49 : f32 to vector<12x12xf32>
    %101 = arith.cmpf ogt, %99, %100 : vector<12x12xf32>
    %cst_50 = arith.constant 2.000000e-01 : f32
    %102 = vector.broadcast %cst_50 : f32 to vector<12x12xf32>
    %103 = arith.mulf %102, %99 : vector<12x12xf32>
    %104 = arith.select %101, %99, %103 : vector<12x12xi1>, vector<12x12xf32>
    %cst_51 = arith.constant 0.000000e+00 : f32
    %105 = vector.broadcast %cst_51 : f32 to vector<12x12xf32>
    %106 = arith.cmpf ogt, %8, %105 : vector<12x12xf32>
    %cst_52 = arith.constant -1.000000e+30 : f32
    %107 = vector.broadcast %cst_52 : f32 to vector<12x12xf32>
    %108 = arith.select %106, %104, %107 : vector<12x12xi1>, vector<12x12xf32>
    %cst_53 = arith.constant dense<0xFF800000> : vector<12xf32>
    %109 = vector.multi_reduction <maximumf>, %108, %cst_53 [1] : vector<12x12xf32> to vector<12xf32>
    %110 = vector.shape_cast %109 : vector<12xf32> to vector<12x1xf32>
    %111 = vector.broadcast %110 : vector<12x1xf32> to vector<12x12xf32>
    %112 = arith.subf %108, %111 : vector<12x12xf32>
    %cst_54 = arith.constant 0.000000e+00 : f32
    %113 = vector.broadcast %cst_54 : f32 to vector<12x12xf32>
    %114 = arith.minimumf %112, %113 : vector<12x12xf32>
    %115 = math.exp %114 : vector<12x12xf32>
    %cst_55 = arith.constant 0.000000e+00 : f32
    %116 = vector.broadcast %cst_55 : f32 to vector<12x12xf32>
    %117 = arith.select %106, %115, %116 : vector<12x12xi1>, vector<12x12xf32>
    %cst_56 = arith.constant dense<0.000000e+00> : vector<12xf32>
    %118 = vector.multi_reduction <add>, %117, %cst_56 [1] : vector<12x12xf32> to vector<12xf32>
    %119 = vector.shape_cast %118 : vector<12xf32> to vector<12x1xf32>
    %cst_57 = arith.constant dense<0.000000e+00> : vector<12x8xf32>
    %120 = tpu.matmul %117, %17, %cst_57 {dimension_numbers = #tpu.dot_dimension_numbers<[1], [0], [0], [1], [0, 0, 1, 1], [], []>} : vector<12x12xf32>, vector<12x8xf32>, vector<12x8xf32> -> vector<12x8xf32>
    %cst_58 = arith.constant 1.000000e-16 : f32
    %121 = vector.broadcast %cst_58 : f32 to vector<12x1xf32>
    %122 = arith.maximumf %119, %121 : vector<12x1xf32>
    %123 = tpu.reciprocal %122 {approx = true} : vector<12x1xf32> -> vector<12x1xf32>
    %124 = vector.broadcast %123 : vector<12x1xf32> to vector<12x8xf32>
    %125 = arith.mulf %120, %124 : vector<12x8xf32>
    %c8 = arith.constant 8 : index
    %c0_59 = arith.constant 0 : index
    %126 = vector.load %arg5[%c8, %c0_59] : memref<17x128xf32, #tpu.memory_space<vmem>>, vector<1x8xf32>
    %127 = vector.broadcast %126 : vector<1x8xf32> to vector<12x8xf32>
    %128 = arith.mulf %125, %127 : vector<12x8xf32>
    %c9 = arith.constant 9 : index
    %c0_60 = arith.constant 0 : index
    %129 = vector.load %arg5[%c9, %c0_60] : memref<17x128xf32, #tpu.memory_space<vmem>>, vector<1x8xf32>
    %130 = vector.broadcast %129 : vector<1x8xf32> to vector<12x8xf32>
    %131 = arith.addf %128, %130 : vector<12x8xf32>
    %cst_61 = arith.constant 0.000000e+00 : f32
    %132 = vector.broadcast %cst_61 : f32 to vector<12x8xf32>
    %133 = arith.maximumf %131, %132 : vector<12x8xf32>
    %cst_62 = arith.constant dense<0.000000e+00> : vector<12x8xf32>
    %134 = tpu.matmul %8, %133, %cst_62 {dimension_numbers = #tpu.dot_dimension_numbers<[1], [0], [0], [1], [0, 0, 1, 1], [], []>} : vector<12x12xf32>, vector<12x8xf32>, vector<12x8xf32> -> vector<12x8xf32>
    %135 = arith.addf %133, %134 : vector<12x8xf32>
    %c80 = arith.constant 80 : index
    %c0_63 = arith.constant 0 : index
    %136 = vector.load %arg6[%c80, %c0_63] : memref<240x128xbf16, #tpu.memory_space<vmem>>, vector<8x8xbf16>
    %137 = arith.extf %136 : vector<8x8xbf16> to vector<8x8xf32>
    %cst_64 = arith.constant dense<0.000000e+00> : vector<12x8xf32>
    %138 = tpu.matmul %135, %137, %cst_64 {dimension_numbers = #tpu.dot_dimension_numbers<[1], [0], [0], [1], [0, 0, 1, 1], [], []>} : vector<12x8xf32>, vector<8x8xf32>, vector<12x8xf32> -> vector<12x8xf32>
    %c10 = arith.constant 10 : index
    %c0_65 = arith.constant 0 : index
    %139 = vector.load %arg5[%c10, %c0_65] : memref<17x128xf32, #tpu.memory_space<vmem>>, vector<1x8xf32>
    %140 = vector.broadcast %139 : vector<1x8xf32> to vector<12x8xf32>
    %141 = arith.addf %138, %140 : vector<12x8xf32>
    %cst_66 = arith.constant 0.000000e+00 : f32
    %142 = vector.broadcast %cst_66 : f32 to vector<12x8xf32>
    %143 = arith.maximumf %141, %142 : vector<12x8xf32>
    %c88 = arith.constant 88 : index
    %c0_67 = arith.constant 0 : index
    %144 = vector.load %arg6[%c88, %c0_67] : memref<240x128xbf16, #tpu.memory_space<vmem>>, vector<8x8xbf16>
    %145 = arith.extf %144 : vector<8x8xbf16> to vector<8x8xf32>
    %cst_68 = arith.constant dense<0.000000e+00> : vector<12x8xf32>
    %146 = tpu.matmul %143, %145, %cst_68 {dimension_numbers = #tpu.dot_dimension_numbers<[1], [0], [0], [1], [0, 0, 1, 1], [], []>} : vector<12x8xf32>, vector<8x8xf32>, vector<12x8xf32> -> vector<12x8xf32>
    %c11 = arith.constant 11 : index
    %c0_69 = arith.constant 0 : index
    %147 = vector.load %arg5[%c11, %c0_69] : memref<17x128xf32, #tpu.memory_space<vmem>>, vector<1x8xf32>
    %148 = vector.broadcast %147 : vector<1x8xf32> to vector<12x8xf32>
    %149 = arith.addf %146, %148 : vector<12x8xf32>
    %cst_70 = arith.constant 0.000000e+00 : f32
    %150 = vector.broadcast %cst_70 : f32 to vector<12x8xf32>
    %151 = arith.maximumf %149, %150 : vector<12x8xf32>
    %cst_71 = arith.constant dense<0.000000e+00> : vector<12x8xf32>
    %152 = tpu.matmul %8, %151, %cst_71 {dimension_numbers = #tpu.dot_dimension_numbers<[1], [0], [0], [1], [0, 0, 1, 1], [], []>} : vector<12x12xf32>, vector<12x8xf32>, vector<12x8xf32> -> vector<12x8xf32>
    %153 = arith.addf %151, %152 : vector<12x8xf32>
    %c96 = arith.constant 96 : index
    %c0_72 = arith.constant 0 : index
    %154 = vector.load %arg6[%c96, %c0_72] : memref<240x128xbf16, #tpu.memory_space<vmem>>, vector<8x8xbf16>
    %155 = arith.extf %154 : vector<8x8xbf16> to vector<8x8xf32>
    %cst_73 = arith.constant dense<0.000000e+00> : vector<12x8xf32>
    %156 = tpu.matmul %153, %155, %cst_73 {dimension_numbers = #tpu.dot_dimension_numbers<[1], [0], [0], [1], [0, 0, 1, 1], [], []>} : vector<12x8xf32>, vector<8x8xf32>, vector<12x8xf32> -> vector<12x8xf32>
    %c12 = arith.constant 12 : index
    %c0_74 = arith.constant 0 : index
    %157 = vector.load %arg5[%c12, %c0_74] : memref<17x128xf32, #tpu.memory_space<vmem>>, vector<1x8xf32>
    %158 = vector.broadcast %157 : vector<1x8xf32> to vector<12x8xf32>
    %159 = arith.addf %156, %158 : vector<12x8xf32>
    %cst_75 = arith.constant 0.000000e+00 : f32
    %160 = vector.broadcast %cst_75 : f32 to vector<12x8xf32>
    %161 = arith.maximumf %159, %160 : vector<12x8xf32>
    %c104 = arith.constant 104 : index
    %c0_76 = arith.constant 0 : index
    %162 = vector.load %arg6[%c104, %c0_76] : memref<240x128xbf16, #tpu.memory_space<vmem>>, vector<8x8xbf16>
    %163 = arith.extf %162 : vector<8x8xbf16> to vector<8x8xf32>
    %cst_77 = arith.constant dense<0.000000e+00> : vector<12x8xf32>
    %164 = tpu.matmul %161, %163, %cst_77 {dimension_numbers = #tpu.dot_dimension_numbers<[1], [0], [0], [1], [0, 0, 1, 1], [], []>} : vector<12x8xf32>, vector<8x8xf32>, vector<12x8xf32> -> vector<12x8xf32>
    %c13 = arith.constant 13 : index
    %c0_78 = arith.constant 0 : index
    %165 = vector.load %arg5[%c13, %c0_78] : memref<17x128xf32, #tpu.memory_space<vmem>>, vector<1x8xf32>
    %166 = vector.broadcast %165 : vector<1x8xf32> to vector<12x8xf32>
    %167 = arith.addf %164, %166 : vector<12x8xf32>
    %cst_79 = arith.constant 0.000000e+00 : f32
    %168 = vector.broadcast %cst_79 : f32 to vector<12x8xf32>
    %169 = arith.maximumf %167, %168 : vector<12x8xf32>
    %170 = tpu.concatenate %133, %151, %169 in 1 : vector<12x8xf32>, vector<12x8xf32>, vector<12x8xf32> -> vector<12x24xf32>
    %c112 = arith.constant 112 : index
    %c0_80 = arith.constant 0 : index
    %171 = vector.load %arg6[%c112, %c0_80] : memref<240x128xbf16, #tpu.memory_space<vmem>>, vector<48x32xbf16>
    %172 = arith.extf %171 : vector<48x32xbf16> to vector<48x32xf32>
    %cst_81 = arith.constant dense<0.000000e+00> : vector<12x32xf32>
    %173 = tpu.matmul %94, %172, %cst_81 {dimension_numbers = #tpu.dot_dimension_numbers<[1], [0], [0], [1], [0, 0, 1, 1], [], []>} : vector<12x48xf32>, vector<48x32xf32>, vector<12x32xf32> -> vector<12x32xf32>
    %c160 = arith.constant 160 : index
    %c0_82 = arith.constant 0 : index
    %174 = vector.load %arg6[%c160, %c0_82] : memref<240x128xbf16, #tpu.memory_space<vmem>>, vector<24x32xbf16>
    %175 = arith.extf %174 : vector<24x32xbf16> to vector<24x32xf32>
    %cst_83 = arith.constant dense<0.000000e+00> : vector<12x32xf32>
    %176 = tpu.matmul %170, %175, %cst_83 {dimension_numbers = #tpu.dot_dimension_numbers<[1], [0], [0], [1], [0, 0, 1, 1], [], []>} : vector<12x24xf32>, vector<24x32xf32>, vector<12x32xf32> -> vector<12x32xf32>
    %177 = arith.addf %173, %176 : vector<12x32xf32>
    %cst_84 = arith.constant dense<0.000000e+00> : vector<2x32xf32>
    %178 = tpu.matmul %11, %177, %cst_84 {dimension_numbers = #tpu.dot_dimension_numbers<[1], [0], [0], [1], [0, 0, 1, 1], [], []>} : vector<2x12xf32>, vector<12x32xf32>, vector<2x32xf32> -> vector<2x32xf32>
    %c14 = arith.constant 14 : index
    %c0_85 = arith.constant 0 : index
    %179 = vector.load %arg5[%c14, %c0_85] : memref<17x128xf32, #tpu.memory_space<vmem>>, vector<1x32xf32>
    %180 = vector.broadcast %179 : vector<1x32xf32> to vector<2x32xf32>
    %181 = arith.addf %178, %180 : vector<2x32xf32>
    %c184 = arith.constant 184 : index
    %c0_86 = arith.constant 0 : index
    %182 = vector.load %arg6[%c184, %c0_86] : memref<240x128xbf16, #tpu.memory_space<vmem>>, vector<32x24xbf16>
    %183 = arith.extf %182 : vector<32x24xbf16> to vector<32x24xf32>
    %cst_87 = arith.constant dense<0.000000e+00> : vector<2x24xf32>
    %184 = tpu.matmul %181, %183, %cst_87 {dimension_numbers = #tpu.dot_dimension_numbers<[1], [0], [0], [1], [0, 0, 1, 1], [], []>} : vector<2x32xf32>, vector<32x24xf32>, vector<2x24xf32> -> vector<2x24xf32>
    %c15 = arith.constant 15 : index
    %c0_88 = arith.constant 0 : index
    %185 = vector.load %arg5[%c15, %c0_88] : memref<17x128xf32, #tpu.memory_space<vmem>>, vector<1x24xf32>
    %186 = vector.broadcast %185 : vector<1x24xf32> to vector<2x24xf32>
    %187 = arith.addf %184, %186 : vector<2x24xf32>
    %cst_89 = arith.constant 0.000000e+00 : f32
    %188 = vector.broadcast %cst_89 : f32 to vector<2x24xf32>
    %189 = arith.maximumf %187, %188 : vector<2x24xf32>
    %c216 = arith.constant 216 : index
    %c0_90 = arith.constant 0 : index
    %190 = vector.load %arg6[%c216, %c0_90] : memref<240x128xbf16, #tpu.memory_space<vmem>>, vector<24x128xbf16>
    %191 = arith.extf %190 : vector<24x128xbf16> to vector<24x128xf32>
    %cst_91 = arith.constant dense<0.000000e+00> : vector<2x128xf32>
    %192 = tpu.matmul %189, %191, %cst_91 {dimension_numbers = #tpu.dot_dimension_numbers<[1], [0], [0], [1], [0, 0, 1, 1], [], []>} : vector<2x24xf32>, vector<24x128xf32>, vector<2x128xf32> -> vector<2x128xf32>
    %c16_92 = arith.constant 16 : index
    %c0_93 = arith.constant 0 : index
    %193 = vector.load %arg5[%c16_92, %c0_93] : memref<17x128xf32, #tpu.memory_space<vmem>>, vector<1x128xf32>
    %194 = vector.broadcast %193 : vector<1x128xf32> to vector<2x128xf32>
    %195 = arith.addf %192, %194 : vector<2x128xf32>
    %c0_94 = arith.constant 0 : index
    %c0_95 = arith.constant 0 : index
    %c0_96 = arith.constant 0 : index
    %196 = vector.load %arg7[%c0_94, %c0_95, %c0_96] : memref<1x2x128xf32, #tpu.memory_space<vmem>>, vector<1x2x128xf32>
    %197 = vector.shape_cast %196 : vector<1x2x128xf32> to vector<2x128xf32>
    %198 = vector.shape_cast %195 : vector<2x128xf32> to vector<1x2x128xf32>
    tpu.vector_store %arg7[%c0_94, %c0_95, %c0_96], %198 {strides = array<i32>} : memref<1x2x128xf32, #tpu.memory_space<vmem>>, vector<1x2x128xf32>,
    return
  }
  func.func @transform_0(%arg0: i32) -> (i32, i32, i32) {
    %c0_i32 = arith.constant 0 : i32
    %c0_i32_0 = arith.constant 0 : i32
    %c0_i32_1 = arith.constant 0 : i32
    return %arg0, %c0_i32, %c0_i32_0 : i32, i32, i32
  }
  func.func @transform_1(%arg0: i32) -> (i32, i32, i32) {
    %c0_i32 = arith.constant 0 : i32
    %c0_i32_0 = arith.constant 0 : i32
    %c0_i32_1 = arith.constant 0 : i32
    return %arg0, %c0_i32, %c0_i32_0 : i32, i32, i32
  }
  func.func @transform_2(%arg0: i32) -> (i32, i32, i32) {
    %c0_i32 = arith.constant 0 : i32
    %c0_i32_0 = arith.constant 0 : i32
    %c0_i32_1 = arith.constant 0 : i32
    return %arg0, %c0_i32, %c0_i32_0 : i32, i32, i32
  }
  func.func @transform_3(%arg0: i32) -> (i32, i32, i32) {
    %c0_i32 = arith.constant 0 : i32
    %c0_i32_0 = arith.constant 0 : i32
    %c0_i32_1 = arith.constant 0 : i32
    return %arg0, %c0_i32, %c0_i32_0 : i32, i32, i32
  }
  func.func @transform_4(%arg0: i32) -> (i32, i32) {
    %c0_i32 = arith.constant 0 : i32
    %c0_i32_0 = arith.constant 0 : i32
    %c0_i32_1 = arith.constant 0 : i32
    return %c0_i32, %c0_i32_0 : i32, i32
  }
  func.func @transform_5(%arg0: i32) -> (i32, i32) {
    %c0_i32 = arith.constant 0 : i32
    %c0_i32_0 = arith.constant 0 : i32
    %c0_i32_1 = arith.constant 0 : i32
    return %c0_i32, %c0_i32_0 : i32, i32
  }
  func.func @transform_6(%arg0: i32) -> (i32, i32, i32) {
    %c0_i32 = arith.constant 0 : i32
    %c0_i32_0 = arith.constant 0 : i32
    %c0_i32_1 = arith.constant 0 : i32
    return %arg0, %c0_i32, %c0_i32_0 : i32, i32, i32
  }
}

</mosaic_0001>

<llo_original>
// kernel: multignn_fused.1
$region0: #{multignn_fused.1}
  #allocation0 [shape = 'u32[]', space=smem, size = 0x4, offset = 0x4, fixed_abs, tag = 'smem constant byte address 0x4 - core index']
  #allocation1 [shape = 'u32[144,128]{1,0:T(1,128)}', space=vmem, size = 0x12000, scoped, tag = 'internal scratch']
  %s0 = inlined_call_operand.vmem [shape: bf16[8,12,11], index: 0, kind: input, shape index: {}]
  %s1 = inlined_call_operand.vmem [shape: bf16[8,12,12], index: 1, kind: input, shape index: {}]
  %s2 = inlined_call_operand.vmem [shape: bf16[8,12,12], index: 2, kind: input, shape index: {}]
  %s3 = inlined_call_operand.vmem [shape: bf16[8,2,12], index: 3, kind: input, shape index: {}]
  %s4 = inlined_call_operand.vmem [shape: f32[17,128], index: 4, kind: input, shape index: {}]
  %s5 = inlined_call_operand.vmem [shape: bf16[240,128], index: 5, kind: input, shape index: {}]
  %s6 = inlined_call_operand.vmem [shape: f32[8,2,128], index: 6, kind: output, shape index: {}]
  %s7 = sld [smem:[#allocation0]]
  $region57: #{multignn_fused.1} parent=0
    _
  %s9 = ssub.s32 1, %s7
  %s10 = scalar_select 0, %s9, %s7
  loop: start=0, step=1, limit=10
  $region2: #{multignn_fused.1} parent=0 // loop_pre_header
    _
  $region3: #{multignn_fused.1} parent=0 // loop_header
    %s12 = sphi 0, %s16
    %p13 = scmp.ge.s32.totalorder %s12, 10
    %s22 = sphi 0, %s24
    %s25 = sphi 0, %s22
    %s26 = sphi 0, %s25
    %s42 = sphi 0, %s26
    %s48 = sphi 0, %s50
    %s51 = sphi 0, %s48
    %s52 = sphi 0, %s51
    %s68 = sphi 0, %s52
    %s74 = sphi 0, %s76
    %s77 = sphi 0, %s74
    %s78 = sphi 0, %s77
    %s94 = sphi 0, %s78
    %s100 = sphi 0, %s102
    %s103 = sphi 0, %s100
    %s104 = sphi 0, %s103
    %s120 = sphi 0, %s104
    %s124 = sphi 0, %s124
    %s126 = sphi 0, %s124
    %s127 = sphi 0, %s126
    %s141 = sphi 0, %s127
    %s145 = sphi 0, %s145
    %s147 = sphi 0, %s145
    %s148 = sphi 0, %s147
    %s162 = sphi 0, %s148
    %s168 = sphi 0, %s170
    %s171 = sphi 0, %s168
    %s172 = sphi 0, %s171
    %s188 = sphi 0, %s172
  $region4: #{multignn_fused.1} parent=0 // loop_header_branch
    %15 = sbr.rel (%p13) target = $region8
  $region5: #{multignn_fused.1} parent=0 // loop_body
    %s17 = ssub.s32 %s12, 1
    %s18 = ssub.s32 %s12, 2
    %s19 = sadd.s32 %s12, 1
    %s20 = ssub.s32 %s12, %s19
    %p21 = scmp.eq.s32.totalorder %s20, 0
    %s23 = sadd.s32 %s22, 1
    %s24 = scalar_select %p21, %s22, %s23
    %p27 = pneg %p21
    %p28 = scmp.eq.s32.totalorder %s12, 7
    %p29 = por %p27, %p28
    %p30 = scmp.ne.s32.totalorder %s22, %s25
    %p31 = scmp.eq.s32.totalorder %s12, 0
    %p32 = por %p30, %p31
    %p33 = scmp.ne.s32.totalorder %s22, %s25
    %p34 = scmp.eq.s32.totalorder %s17, 7
    %p35 = por %p33, %p34
    %p36 = scmp.ne.s32.totalorder %s25, %s26
    %p37 = scmp.eq.s32.totalorder %s17, 0
    %p38 = por %p36, %p37
    %p39 = scmp.ne.s32.totalorder %s25, %s26
    %p40 = scmp.eq.s32.totalorder %s18, 7
    %p41 = por %p39, %p40
    %p43 = scmp.ne.s32.totalorder %s26, %s42
    %p44 = scmp.eq.s32.totalorder %s18, 0
    %p45 = por %p43, %p44
    %s46 = ssub.s32 %s12, %s19
    %p47 = scmp.eq.s32.totalorder %s46, 0
    %s49 = sadd.s32 %s48, 1
    %s50 = scalar_select %p47, %s48, %s49
    %p53 = pneg %p47
    %p54 = scmp.eq.s32.totalorder %s12, 7
    %p55 = por %p53, %p54
    %p56 = scmp.ne.s32.totalorder %s48, %s51
    %p57 = scmp.eq.s32.totalorder %s12, 0
    %p58 = por %p56, %p57
    %p59 = scmp.ne.s32.totalorder %s48, %s51
    %p60 = scmp.eq.s32.totalorder %s17, 7
    %p61 = por %p59, %p60
    %p62 = scmp.ne.s32.totalorder %s51, %s52
    %p63 = scmp.eq.s32.totalorder %s17, 0
    %p64 = por %p62, %p63
    %p65 = scmp.ne.s32.totalorder %s51, %s52
    %p66 = scmp.eq.s32.totalorder %s18, 7
    %p67 = por %p65, %p66
    %p69 = scmp.ne.s32.totalorder %s52, %s68
    %p70 = scmp.eq.s32.totalorder %s18, 0
    %p71 = por %p69, %p70
    %s72 = ssub.s32 %s12, %s19
    %p73 = scmp.eq.s32.totalorder %s72, 0
    %s75 = sadd.s32 %s74, 1
    %s76 = scalar_select %p73, %s74, %s75
    %p79 = pneg %p73
    %p80 = scmp.eq.s32.totalorder %s12, 7
    %p81 = por %p79, %p80
    %p82 = scmp.ne.s32.totalorder %s74, %s77
    %p83 = scmp.eq.s32.totalorder %s12, 0
    %p84 = por %p82, %p83
    %p85 = scmp.ne.s32.totalorder %s74, %s77
    %p86 = scmp.eq.s32.totalorder %s17, 7
    %p87 = por %p85, %p86
    %p88 = scmp.ne.s32.totalorder %s77, %s78
    %p89 = scmp.eq.s32.totalorder %s17, 0
    %p90 = por %p88, %p89
    %p91 = scmp.ne.s32.totalorder %s77, %s78
    %p92 = scmp.eq.s32.totalorder %s18, 7
    %p93 = por %p91, %p92
    %p95 = scmp.ne.s32.totalorder %s78, %s94
    %p96 = scmp.eq.s32.totalorder %s18, 0
    %p97 = por %p95, %p96
    %s98 = ssub.s32 %s12, %s19
    %p99 = scmp.eq.s32.totalorder %s98, 0
    %s101 = sadd.s32 %s100, 1
    %s102 = scalar_select %p99, %s100, %s101
    %p105 = pneg %p99
    %p106 = scmp.eq.s32.totalorder %s12, 7
    %p107 = por %p105, %p106
    %p108 = scmp.ne.s32.totalorder %s100, %s103
    %p109 = scmp.eq.s32.totalorder %s12, 0
    %p110 = por %p108, %p109
    %p111 = scmp.ne.s32.totalorder %s100, %s103
    %p112 = scmp.eq.s32.totalorder %s17, 7
    %p113 = por %p111, %p112
    %p114 = scmp.ne.s32.totalorder %s103, %s104
    %p115 = scmp.eq.s32.totalorder %s17, 0
    %p116 = por %p114, %p115
    %p117 = scmp.ne.s32.totalorder %s103, %s104
    %p118 = scmp.eq.s32.totalorder %s18, 7
    %p119 = por %p117, %p118
    %p121 = scmp.ne.s32.totalorder %s104, %s120
    %p122 = scmp.eq.s32.totalorder %s18, 0
    %p123 = por %p121, %p122
    %s125 = sadd.s32 %s124, 1
    %p128 = scmp.eq.s32.totalorder %s12, 7
    %p129 = scmp.ne.s32.totalorder %s124, %s126
    %p130 = scmp.eq.s32.totalorder %s12, 0
    %p131 = por %p129, %p130
    %p132 = scmp.ne.s32.totalorder %s124, %s126
    %p133 = scmp.eq.s32.totalorder %s17, 7
    %p134 = por %p132, %p133
    %p135 = scmp.ne.s32.totalorder %s126, %s127
    %p136 = scmp.eq.s32.totalorder %s17, 0
    %p137 = por %p135, %p136
    %p138 = scmp.ne.s32.totalorder %s126, %s127
    %p139 = scmp.eq.s32.totalorder %s18, 7
    %p140 = por %p138, %p139
    %p142 = scmp.ne.s32.totalorder %s127, %s141
    %p143 = scmp.eq.s32.totalorder %s18, 0
    %p144 = por %p142, %p143
    %s146 = sadd.s32 %s145, 1
    %p149 = scmp.eq.s32.totalorder %s12, 7
    %p150 = scmp.ne.s32.totalorder %s145, %s147
    %p151 = scmp.eq.s32.totalorder %s12, 0
    %p152 = por %p150, %p151
    %p153 = scmp.ne.s32.totalorder %s145, %s147
    %p154 = scmp.eq.s32.totalorder %s17, 7
    %p155 = por %p153, %p154
    %p156 = scmp.ne.s32.totalorder %s147, %s148
    %p157 = scmp.eq.s32.totalorder %s17, 0
    %p158 = por %p156, %p157
    %p159 = scmp.ne.s32.totalorder %s147, %s148
    %p160 = scmp.eq.s32.totalorder %s18, 7
    %p161 = por %p159, %p160
    %p163 = scmp.ne.s32.totalorder %s148, %s162
    %p164 = scmp.eq.s32.totalorder %s18, 0
    %p165 = por %p163, %p164
    %s166 = ssub.s32 %s12, %s19
    %p167 = scmp.eq.s32.totalorder %s166, 0
    %s169 = sadd.s32 %s168, 1
    %s170 = scalar_select %p167, %s168, %s169
    %p173 = pneg %p167
    %p174 = scmp.eq.s32.totalorder %s12, 7
    %p175 = por %p173, %p174
    %p176 = scmp.ne.s32.totalorder %s168, %s171
    %p177 = scmp.eq.s32.totalorder %s12, 0
    %p178 = por %p176, %p177
    %p179 = scmp.ne.s32.totalorder %s168, %s171
    %p180 = scmp.eq.s32.totalorder %s17, 7
    %p181 = por %p179, %p180
    %p182 = scmp.ne.s32.totalorder %s171, %s172
    %p183 = scmp.eq.s32.totalorder %s17, 0
    %p184 = por %p182, %p183
    %p185 = scmp.ne.s32.totalorder %s171, %s172
    %p186 = scmp.eq.s32.totalorder %s18, 7
    %p187 = por %p185, %p186
    %p189 = scmp.ne.s32.totalorder %s172, %s188
    %p190 = scmp.eq.s32.totalorder %s18, 0
    %p191 = por %p189, %p190
    %p192 = scmp.le.s32.totalorder 1, %s12
    %p193 = scmp.lt.s32.totalorder %s12, 9
    %p194 = pnand %p192, %p193
    %p195 = pneg %p194
    // Predicated region
    $region9: #{multignn_fused.1} parent=5 // pred_check
      _
    $region10: #{multignn_fused.1} parent=5 // pred_check_branch
      %197 = sbr.rel (%p194) target = $region12
    $region11: #{multignn_fused.1} parent=5 // pred_region
      %s198 = ssub.s32 %s12, 1
      // Predicated region
      $region13: #{multignn_fused.1} parent=11 // pred_check
        %p199 = pneg %p137
      $region14: #{multignn_fused.1} parent=11 // pred_check_branch
        %201 = sbr.rel (%p199) target = $region16
      $region15: #{multignn_fused.1} parent=11 // pred_region
        _
      $region16: #{multignn_fused.1} parent=11 // pred_fallthru
        _
      // Predicated region
      $region17: #{multignn_fused.1} parent=11 // pred_check
        %p202 = pneg %p158
      $region18: #{multignn_fused.1} parent=11 // pred_check_branch
        %204 = sbr.rel (%p202) target = $region20
      $region19: #{multignn_fused.1} parent=11 // pred_region
        _
      $region20: #{multignn_fused.1} parent=11 // pred_fallthru
        _
    $region12: #{multignn_fused.1} parent=5 // pred_fallthru
      _
    %p205 = scmp.lt.s32.totalorder %s12, 8
    // Predicated region
    $region21: #{multignn_fused.1} parent=5 // pred_check
      %p206 = pneg %p205
    $region22: #{multignn_fused.1} parent=5 // pred_check_branch
      %208 = sbr.rel (%p206) target = $region24
    $region23: #{multignn_fused.1} parent=5 // pred_region
      // Predicated region
      $region25: #{multignn_fused.1} parent=23 // pred_check
        %p209 = pneg %p32
      $region26: #{multignn_fused.1} parent=23 // pred_check_branch
        %211 = sbr.rel (%p209) target = $region28
      $region27: #{multignn_fused.1} parent=23 // pred_region
        %p212 = scmp.lt.s32.totalorder %s12, 7
        %s213 = scalar_select %p212, %s12, 7
        %s214 = smul.addr %s213, 2
        %s215 = smul.addr %s214, 4
        %s216 = scalar_lea.vmem %s0, %s215
      $region28: #{multignn_fused.1} parent=23 // pred_fallthru
        _
      // Predicated region
      $region29: #{multignn_fused.1} parent=23 // pred_check
        %p217 = pneg %p58
      $region30: #{multignn_fused.1} parent=23 // pred_check_branch
        %219 = sbr.rel (%p217) target = $region32
      $region31: #{multignn_fused.1} parent=23 // pred_region
        %p220 = scmp.lt.s32.totalorder %s12, 7
        %s221 = scalar_select %p220, %s12, 7
        %s222 = smul.addr %s221, 2
        %s223 = smul.addr %s222, 4
        %s224 = scalar_lea.vmem %s1, %s223
      $region32: #{multignn_fused.1} parent=23 // pred_fallthru
        _
      // Predicated region
      $region33: #{multignn_fused.1} parent=23 // pred_check
        %p225 = pneg %p84
      $region34: #{multignn_fused.1} parent=23 // pred_check_branch
        %227 = sbr.rel (%p225) target = $region36
      $region35: #{multignn_fused.1} parent=23 // pred_region
        %p228 = scmp.lt.s32.totalorder %s12, 7
        %s229 = scalar_select %p228, %s12, 7
        %s230 = smul.addr %s229, 2
        %s231 = smul.addr %s230, 4
        %s232 = scalar_lea.vmem %s2, %s231
      $region36: #{multignn_fused.1} parent=23 // pred_fallthru
        _
      // Predicated region
      $region37: #{multignn_fused.1} parent=23 // pred_check
        %p233 = pneg %p110
      $region38: #{multignn_fused.1} parent=23 // pred_check_branch
        %235 = sbr.rel (%p233) target = $region40
      $region39: #{multignn_fused.1} parent=23 // pred_region
        %p236 = scmp.lt.s32.totalorder %s12, 7
        %s237 = scalar_select %p236, %s12, 7
        %s238 = scalar_lea.vmem %s3, %s237
      $region40: #{multignn_fused.1} parent=23 // pred_fallthru
        _
    $region24: #{multignn_fused.1} parent=5 // pred_fallthru
      _
    %p239 = scmp.le.s32.totalorder 1, %s12
    %p240 = scmp.lt.s32.totalorder %s12, 9
    %p241 = pnand %p239, %p240
    %p242 = pneg %p241
    // Predicated region
    $region41: #{multignn_fused.1} parent=5 // pred_check
      _
    $region42: #{multignn_fused.1} parent=5 // pred_check_branch
      %244 = sbr.rel (%p241) target = $region44
    $region43: #{multignn_fused.1} parent=5 // pred_region
      %s245 = ssub.s32 %s12, 1
      %p246 = scmp.lt.s32.totalorder %s17, 7
      %s247 = scalar_select %p246, %s17, 7
      %s248 = smul.addr %s247, 2
      %s249 = smul.addr %s248, 4
      %s250 = scalar_lea.vmem %s0, %s249
      %p251 = pneg %p38
      %p252 = pneg %p35
      %p253 = scmp.lt.s32.totalorder %s17, 7
      %s254 = scalar_select %p253, %s17, 7
      %s255 = smul.addr %s254, 2
      %s256 = smul.addr %s255, 4
      %s257 = scalar_lea.vmem %s1, %s256
      %p258 = pneg %p64
      %p259 = pneg %p61
      %p260 = scmp.lt.s32.totalorder %s17, 7
      %s261 = scalar_select %p260, %s17, 7
      %s262 = smul.addr %s261, 2
      %s263 = smul.addr %s262, 4
      %s264 = scalar_lea.vmem %s2, %s263
      %p265 = pneg %p90
      %p266 = pneg %p87
      %p267 = scmp.lt.s32.totalorder %s17, 7
      %s268 = scalar_select %p267, %s17, 7
      %s269 = scalar_lea.vmem %s3, %s268
      %p270 = pneg %p116
      %p271 = pneg %p113
      %p272 = pneg %p137
      %p273 = pneg %p134
      %p274 = pneg %p158
      %p275 = pneg %p155
      %p276 = pneg %p184
      %p277 = pneg %p181
      %p278 = scmp.lt.s32.totalorder %s17, 7
      %s279 = scalar_select %p278, %s17, 7
      %s280 = smul.addr %s279, 2
      %s281 = scalar_lea.vmem %s6, %s280
      %p282 = scmp.lt.s32.totalorder %s17, 7
      %s283 = scalar_select %p282, %s17, 7
      %s284 = smul.addr %s283, 2
      %s285 = smul.addr %s284, 4
      %s286 = scalar_lea.vmem %s0, %s285
      %p287 = scmp.lt.s32.totalorder %s17, 7
      %s288 = scalar_select %p287, %s17, 7
      %s289 = smul.addr %s288, 2
      %s290 = smul.addr %s289, 4
      %s291 = scalar_lea.vmem %s1, %s290
      %p292 = scmp.lt.s32.totalorder %s17, 7
      %s293 = scalar_select %p292, %s17, 7
      %s294 = smul.addr %s293, 2
      %s295 = smul.addr %s294, 4
      %s296 = scalar_lea.vmem %s2, %s295
      %p297 = scmp.lt.s32.totalorder %s17, 7
      %s298 = scalar_select %p297, %s17, 7
      %s299 = scalar_lea.vmem %s3, %s298
      %p300 = scmp.lt.s32.totalorder %s17, 7
      %s301 = scalar_select %p300, %s17, 7
      %s302 = smul.addr %s301, 2
      %s303 = scalar_lea.vmem %s6, %s302
      %v304 = vld [vmem:[%s286] sm:$0xf]
      %v305 = vld [vmem:[%s286 + $0x4] sm:$0x3]
      %v306 = vunpack.c.l.bf16 %v304
      %v307 = vunpack.c.l.bf16 %v305
      %v308 = vld [vmem:[%s291] sm:$0xf]
      %v309 = vld [vmem:[%s291 + $0x4] sm:$0x3]
      %v310 = vunpack.c.l.bf16 %v308
      %v311 = vunpack.c.l.bf16 %v309
      %v312 = vld [vmem:[%s296] sm:$0xf]
      %v313 = vld [vmem:[%s296 + $0x4] sm:$0x3]
      %v314 = vunpack.c.l.bf16 %v312
      %v315 = vunpack.c.l.bf16 %v313
      %v316 = vld [vmem:[%s299] sm:$0x1]
      %v317 = vunpack.c.l.bf16 %v316
      %v318 = vld [vmem:[%s5] sm:$0xf]
      %v319 = vld [vmem:[%s5 + $0x4] sm:$0x3]
      %v320 = vunpack.c.l.bf16 %v318
      %v321 = vunpack.c.l.bf16 %v319
      %vm322 = vcmask 89088
      %v324 = vsel %vm322, %v306, 0
      %v327 = vsel %vm322, %v307, 0
      %vm329 = vcmask 1042432
      %v331 = vsel %vm329, %v321, 0
      %333 = vmatprep.subr.mxu0 0.0
      %334 = vmatpush1.msra.mxu0 %v320
      %335 = vmatprep.subr.mxu0 0.0
      %336 = vmatpush1.msra.mxu0 %v331
      %337 = vmatprep.subr.mxu0 0.0
      %338 = vmatpush1.msra.mxu0 0.0
      %339 = vmatprep.subr.mxu0 0.0
      %340 = vmatpush1.msra.mxu0 0.0
      %341 = vmatprep.subr.mxu0 0.0
      %342 = vmatpush1.msra.mxu0 0.0
      %343 = vmatprep.subr.mxu0 0.0
      %344 = vmatpush1.msra.mxu0 0.0
      %345 = vmatprep.subr.mxu0 0.0
      %346 = vmatpush1.msra.mxu0 0.0
      %347 = vmatprep.subr.mxu0 0.0
      %348 = vmatpush1.msra.mxu0 0.0
      %349 = vmatprep.subr.mxu0 0.0
      %350 = vmatpush1.msra.mxu0 0.0
      %351 = vmatprep.subr.mxu0 0.0
      %352 = vmatpush1.msra.mxu0 0.0
      %353 = vmatprep.subr.mxu0 0.0
      %354 = vmatpush1.msra.mxu0 0.0
      %355 = vmatprep.subr.mxu0 0.0
      %356 = vmatpush1.msra.mxu0 0.0
      %357 = vmatprep.subr.mxu0 0.0
      %358 = vmatpush1.msra.mxu0 0.0
      %359 = vmatprep.subr.mxu0 0.0
      %360 = vmatpush1.msra.mxu0 0.0
      %361 = vmatprep.subr.mxu0 0.0
      %362 = vmatpush1.msra.mxu0 0.0
      %363 = vmatprep.subr.mxu0 0.0
      %364 = vmatpush1.msra.mxu0 0.0
      %365 = vmatprep.subr.mxu0 0.0
      %366 = vmatpush1.msra.mxu0 0.0
      %367 = vmatprep.subr.mxu0 0.0
      %368 = vmatpush1.msra.mxu0 0.0
      %369 = vmatprep.subr.mxu0 0.0
      %370 = vmatpush1.msra.mxu0 0.0
      %371 = vmatprep.subr.mxu0 0.0
      %372 = vmatpush1.msra.mxu0 0.0
      %373 = vmatprep.subr.mxu0 0.0
      %374 = vmatpush1.msra.mxu0 0.0
      %375 = vmatprep.subr.mxu0 0.0
      %376 = vmatpush1.msra.mxu0 0.0
      %377 = vmatprep.subr.mxu0 0.0
      %378 = vmatpush1.msra.mxu0 0.0
      %379 = vmatprep.subr.mxu0 0.0
      %380 = vmatpush1.msra.mxu0 0.0
      %381 = vmatprep.subr.mxu0 0.0
      %382 = vmatpush1.msra.mxu0 0.0
      %383 = vmatprep.subr.mxu0 0.0
      %384 = vmatpush1.msra.mxu0 0.0
      %385 = vmatprep.subr.mxu0 0.0
      %386 = vmatpush1.msra.mxu0 0.0
      %387 = vmatprep.subr.mxu0 0.0
      %388 = vmatpush1.msra.mxu0 0.0
      %389 = vmatprep.subr.mxu0 0.0
      %390 = vmatpush1.msra.mxu0 0.0
      %391 = vmatprep.subr.mxu0 0.0
      %392 = vmatpush1.msra.mxu0 0.0
      %393 = vmatprep.subr.mxu0 0.0
      %394 = vmatpush1.msra.mxu0 0.0
      %395 = vmatprep.subr.mxu0 0.0
      %396 = vmatpush1.msra.mxu0 0.0
      %397 = vmatprep.mubr.f32.mxu0 0.0
      %398 = vmatmul.mubr.f32.gmra.mrb[0].mxu0 %v324
      %v399 = vpop.f32.mrb[0].mxu0
      %v400 = vadd.f32 0.0, %v399
      %v401 = vpop.f32.mrb[0].mxu0
      %402 = vmatprep.mubr.f32.mxu0 0.0
      %403 = vmatmul.mubr.f32.gmra.mrb[0].mxu0 %v327
      %v404 = vpop.f32.mrb[0].mxu0
      %v405 = vadd.f32 0.0, %v404
      %v406 = vpop.f32.mrb[0].mxu0
      %407 = vdwg.mxu0
      %v408 = vld [vmem:[%s4] sm:$0x1]
      %vm409 = vcmask 130048
      %v411 = vsel %vm409, %v408, 0
      %v414 = vsel %vm409, %v400, 0
      %v417 = vsel %vm409, %v405, 0
      %419 = vmatprep.subr.mxu0 0.0
      %420 = vmatpush1.xpose.msra.mxu0 %v414
      %421 = vmatprep.subr.mxu0 0.0
      %422 = vmatpush1.xpose.msra.mxu0 %v417
      %423 = vmatprep.subr.mxu0 0.0
      %424 = vmatpush1.xpose.msra.mxu0 0.0
      %425 = vmatprep.subr.mxu0 0.0
      %426 = vmatpush1.xpose.msra.mxu0 0.0
      %427 = vmatprep.subr.mxu0 0.0
      %428 = vmatpush1.xpose.msra.mxu0 0.0
      %429 = vmatprep.subr.mxu0 0.0
      %430 = vmatpush1.xpose.msra.mxu0 0.0
      %431 = vmatprep.subr.mxu0 0.0
      %432 = vmatpush1.xpose.msra.mxu0 0.0
      %433 = vmatprep.subr.mxu0 0.0
      %434 = vmatpush1.xpose.msra.mxu0 0.0
      %435 = vmatprep.subr.mxu0 0.0
      %436 = vmatpush1.xpose.msra.mxu0 0.0
      %437 = vmatprep.subr.mxu0 0.0
      %438 = vmatpush1.xpose.msra.mxu0 0.0
      %439 = vmatprep.subr.mxu0 0.0
      %440 = vmatpush1.xpose.msra.mxu0 0.0
      %441 = vmatprep.subr.mxu0 0.0
      %442 = vmatpush1.xpose.msra.mxu0 0.0
      %443 = vmatprep.subr.mxu0 0.0
      %444 = vmatpush1.xpose.msra.mxu0 0.0
      %445 = vmatprep.subr.mxu0 0.0
      %446 = vmatpush1.xpose.msra.mxu0 0.0
      %447 = vmatprep.subr.mxu0 0.0
      %448 = vmatpush1.xpose.msra.mxu0 0.0
      %449 = vmatprep.subr.mxu0 0.0
      %450 = vmatpush1.xpose.msra.mxu0 0.0
      %451 = vmatprep.subr.mxu0 0.0
      %452 = vmatpush1.xpose.msra.mxu0 0.0
      %453 = vmatprep.subr.mxu0 0.0
      %454 = vmatpush1.xpose.msra.mxu0 0.0
      %455 = vmatprep.subr.mxu0 0.0
      %456 = vmatpush1.xpose.msra.mxu0 0.0
      %457 = vmatprep.subr.mxu0 0.0
      %458 = vmatpush1.xpose.msra.mxu0 0.0
      %459 = vmatprep.subr.mxu0 0.0
      %460 = vmatpush1.xpose.msra.mxu0 0.0
      %461 = vmatprep.subr.mxu0 0.0
      %462 = vmatpush1.xpose.msra.mxu0 0.0
      %463 = vmatprep.subr.mxu0 0.0
      %464 = vmatpush1.xpose.msra.mxu0 0.0
      %465 = vmatprep.subr.mxu0 0.0
      %466 = vmatpush1.xpose.msra.mxu0 0.0
      %467 = vmatprep.subr.mxu0 0.0
      %468 = vmatpush1.xpose.msra.mxu0 0.0
      %469 = vmatprep.subr.mxu0 0.0
      %470 = vmatpush1.xpose.msra.mxu0 0.0
      %471 = vmatprep.subr.mxu0 0.0
      %472 = vmatpush1.xpose.msra.mxu0 0.0
      %473 = vmatprep.subr.mxu0 0.0
      %474 = vmatpush1.xpose.msra.mxu0 0.0
      %475 = vmatprep.subr.mxu0 0.0
      %476 = vmatpush1.xpose.msra.mxu0 0.0
      %477 = vmatprep.subr.mxu0 0.0
      %478 = vmatpush1.xpose.msra.mxu0 0.0
      %479 = vmatprep.subr.mxu0 0.0
      %480 = vmatpush1.xpose.msra.mxu0 0.0
      %481 = vmatprep.subr.mxu0 0.0
      %482 = vmatpush1.xpose.msra.mxu0 0.0
      %483 = vmatprep.mubr.f32.mxu0 0.0
      %484 = vmatmul.mubr.f32.gmra.mrb[0].mxu0 %v411
      %v485 = vpop.f32.mrb[0].mxu0
      %v486 = vadd.f32 0.0, %v485
      %v487 = vpop.f32.mrb[0].mxu0
      %488 = vdwg.mxu0
      %489 = vset.pattern.permute.xlu0 16
      %490 = vperm.xlu0 %489, %v400
      %v491 = vpop.permute.xlu0 %490
      %493 = vset.pattern.permute.xlu0 16
      %494 = vperm.xlu0 %493, %v405
      %v495 = vpop.permute.xlu0 %494
      %v497 = vlaneseq
      %v498 = vshrl.u32 %v497, 7
      %v499 = vsub.s32 0, %v498
      %v500 = vrot.slane %v486, %v499
      %v501 = vadd.f32 %v491, %v500
      %v502 = vadd.f32 %v495, %v500
      %vm503 = vcmp.gt.f32.partialorder %v501, 0.0
      %vm504 = vcmp.gt.f32.partialorder %v502, 0.0
      %v505 = vmul.f32 %v501, 0.2
      %v506 = vmul.f32 %v502, 0.2
      %v507 = vsel %vm503, %v501, %v505
      %v508 = vsel %vm504, %v502, %v506
      %vm509 = vcmp.gt.f32.partialorder %v310, 0.0
      %vm510 = vcmp.gt.f32.partialorder %v311, 0.0
      %v511 = vsel %vm509, %v507, -1e+30
      %v512 = vsel %vm510, %v508, -1e+30
      %vm513 = vcmask 97280
      %v514 = vsel %vm513, %v511, -inf
      %515 = vmax.xlane.f32.xlu0 %v514
      %v516 = vpop.xlane.xlu0 %515
      %vm517 = vcmask 93184
      %v518 = vsel %vm517, %v512, -inf
      %519 = vmax.xlane.f32.xlu0 %v518
      %v520 = vpop.xlane.xlu0 %519
      %v521 = vsub.f32 %v511, %v516
      %v522 = vsub.f32 %v512, %v520
      %v523 = vmin.f32 %v521, 0.0
      %v524 = vmin.f32 %v522, 0.0
      %v525 = vmul.f32 %v523, 1.442695
      %v526 = vpow.pop %v525
      %v527 = vmul.f32 %v524, 1.442695
      %v528 = vpow.pop %v527
      %v529 = vsel %vm509, %v526, 0.0
      %v530 = vsel %vm510, %v528, 0.0
      %v531 = vsel %vm513, %v529, 0.0
      %532 = vadd.xlane.f32.xlu0 %v531
      %v533 = vpop.xlane.xlu0 %532
      %v534 = vsel %vm517, %v530, 0.0
      %535 = vadd.xlane.f32.xlu0 %v534
      %v536 = vpop.xlane.xlu0 %535
      %v538 = vsel %vm513, %v529, 0
      %v541 = vsel %vm513, %v530, 0
      %vm543 = vcmask 1043456
      %v544 = vsel %vm543, %v405, 0
      %546 = vmatprep.subr.mxu0 0.0
      %547 = vmatpush1.msra.mxu0 %v400
      %548 = vmatprep.subr.mxu0 0.0
      %549 = vmatpush1.msra.mxu0 %v544
      %550 = vmatprep.subr.mxu0 0.0
      %551 = vmatpush1.msra.mxu0 0.0
      %552 = vmatprep.subr.mxu0 0.0
      %553 = vmatpush1.msra.mxu0 0.0
      %554 = vmatprep.subr.mxu0 0.0
      %555 = vmatpush1.msra.mxu0 0.0
      %556 = vmatprep.subr.mxu0 0.0
      %557 = vmatpush1.msra.mxu0 0.0
      %558 = vmatprep.subr.mxu0 0.0
      %559 = vmatpush1.msra.mxu0 0.0
      %560 = vmatprep.subr.mxu0 0.0
      %561 = vmatpush1.msra.mxu0 0.0
      %562 = vmatprep.subr.mxu0 0.0
      %563 = vmatpush1.msra.mxu0 0.0
      %564 = vmatprep.subr.mxu0 0.0
      %565 = vmatpush1.msra.mxu0 0.0
      %566 = vmatprep.subr.mxu0 0.0
      %567 = vmatpush1.msra.mxu0 0.0
      %568 = vmatprep.subr.mxu0 0.0
      %569 = vmatpush1.msra.mxu0 0.0
      %570 = vmatprep.subr.mxu0 0.0
      %571 = vmatpush1.msra.mxu0 0.0
      %572 = vmatprep.subr.mxu0 0.0
      %573 = vmatpush1.msra.mxu0 0.0
      %574 = vmatprep.subr.mxu0 0.0
      %575 = vmatpush1.msra.mxu0 0.0
      %576 = vmatprep.subr.mxu0 0.0
      %577 = vmatpush1.msra.mxu0 0.0
      %578 = vmatprep.subr.mxu0 0.0
      %579 = vmatpush1.msra.mxu0 0.0
      %580 = vmatprep.subr.mxu0 0.0
      %581 = vmatpush1.msra.mxu0 0.0
      %582 = vmatprep.subr.mxu0 0.0
      %583 = vmatpush1.msra.mxu0 0.0
      %584 = vmatprep.subr.mxu0 0.0
      %585 = vmatpush1.msra.mxu0 0.0
      %586 = vmatprep.subr.mxu0 0.0
      %587 = vmatpush1.msra.mxu0 0.0
      %588 = vmatprep.subr.mxu0 0.0
      %589 = vmatpush1.msra.mxu0 0.0
      %590 = vmatprep.subr.mxu0 0.0
      %591 = vmatpush1.msra.mxu0 0.0
      %592 = vmatprep.subr.mxu0 0.0
      %593 = vmatpush1.msra.mxu0 0.0
      %594 = vmatprep.subr.mxu0 0.0
      %595 = vmatpush1.msra.mxu0 0.0
      %596 = vmatprep.subr.mxu0 0.0
      %597 = vmatpush1.msra.mxu0 0.0
      %598 = vmatprep.subr.mxu0 0.0
      %599 = vmatpush1.msra.mxu0 0.0
      %600 = vmatprep.subr.mxu0 0.0
      %601 = vmatpush1.msra.mxu0 0.0
      %602 = vmatprep.subr.mxu0 0.0
      %603 = vmatpush1.msra.mxu0 0.0
      %604 = vmatprep.subr.mxu0 0.0
      %605 = vmatpush1.msra.mxu0 0.0
      %606 = vmatprep.subr.mxu0 0.0
      %607 = vmatpush1.msra.mxu0 0.0
      %608 = vmatprep.subr.mxu0 0.0
      %609 = vmatpush1.msra.mxu0 0.0
      %610 = vmatprep.mubr.f32.mxu0 0.0
      %611 = vmatmul.mubr.f32.gmra.mrb[0].mxu0 %v538
      %v612 = vpop.f32.mrb[0].mxu0
      %v613 = vadd.f32 0.0, %v612
      %v614 = vpop.f32.mrb[0].mxu0
      %615 = vmatprep.mubr.f32.mxu0 0.0
      %616 = vmatmul.mubr.f32.gmra.mrb[0].mxu0 %v541
      %v617 = vpop.f32.mrb[0].mxu0
      %v618 = vadd.f32 0.0, %v617
      %v619 = vpop.f32.mrb[0].mxu0
      %620 = vdwg.mxu0
      %v621 = vmax.f32 %v533, 1e-16
      %v622 = vmax.f32 %v536, 1e-16
      %v623 = vrcp.pop %v621
      %v624 = vrcp.pop %v622
      %v625 = vmul.f32 %v613, %v623
      %v626 = vmul.f32 %v618, %v624
      %v627 = vld [vmem:[%s4 + $0x1] sm:$0x1]
      %v628 = vlaneseq
      %v629 = vshrl.u32 %v628, 7
      %v630 = vsub.s32 0, %v629
      %v631 = vrot.slane %v627, %v630
      %v632 = vmul.f32 %v625, %v631
      %v633 = vmul.f32 %v626, %v631
      %v634 = vld [vmem:[%s4 + $0x2] sm:$0x1]
      %v635 = vlaneseq
      %v636 = vshrl.u32 %v635, 7
      %v637 = vsub.s32 0, %v636
      %v638 = vrot.slane %v634, %v637
      %v639 = vadd.f32 %v632, %v638
      %v640 = vadd.f32 %v633, %v638
      %v641 = vmax.f32 %v639, 0.0
      %v642 = vmax.f32 %v640, 0.0
      %v644 = vsel %vm513, %v310, 0
      %v647 = vsel %vm513, %v311, 0
      %v650 = vsel %vm543, %v642, 0
      %652 = vmatprep.subr.mxu0 0.0
      %653 = vmatpush1.msra.mxu0 %v641
      %654 = vmatprep.subr.mxu0 0.0
      %655 = vmatpush1.msra.mxu0 %v650
      %656 = vmatprep.subr.mxu0 0.0
      %657 = vmatpush1.msra.mxu0 0.0
      %658 = vmatprep.subr.mxu0 0.0
      %659 = vmatpush1.msra.mxu0 0.0
      %660 = vmatprep.subr.mxu0 0.0
      %661 = vmatpush1.msra.mxu0 0.0
      %662 = vmatprep.subr.mxu0 0.0
      %663 = vmatpush1.msra.mxu0 0.0
      %664 = vmatprep.subr.mxu0 0.0
      %665 = vmatpush1.msra.mxu0 0.0
      %666 = vmatprep.subr.mxu0 0.0
      %667 = vmatpush1.msra.mxu0 0.0
      %668 = vmatprep.subr.mxu0 0.0
      %669 = vmatpush1.msra.mxu0 0.0
      %670 = vmatprep.subr.mxu0 0.0
      %671 = vmatpush1.msra.mxu0 0.0
      %672 = vmatprep.subr.mxu0 0.0
      %673 = vmatpush1.msra.mxu0 0.0
      %674 = vmatprep.subr.mxu0 0.0
      %675 = vmatpush1.msra.mxu0 0.0
      %676 = vmatprep.subr.mxu0 0.0
      %677 = vmatpush1.msra.mxu0 0.0
      %678 = vmatprep.subr.mxu0 0.0
      %679 = vmatpush1.msra.mxu0 0.0
      %680 = vmatprep.subr.mxu0 0.0
      %681 = vmatpush1.msra.mxu0 0.0
      %682 = vmatprep.subr.mxu0 0.0
      %683 = vmatpush1.msra.mxu0 0.0
      %684 = vmatprep.subr.mxu0 0.0
      %685 = vmatpush1.msra.mxu0 0.0
      %686 = vmatprep.subr.mxu0 0.0
      %687 = vmatpush1.msra.mxu0 0.0
      %688 = vmatprep.subr.mxu0 0.0
      %689 = vmatpush1.msra.mxu0 0.0
      %690 = vmatprep.subr.mxu0 0.0
      %691 = vmatpush1.msra.mxu0 0.0
      %692 = vmatprep.subr.mxu0 0.0
      %693 = vmatpush1.msra.mxu0 0.0
      %694 = vmatprep.subr.mxu0 0.0
      %695 = vmatpush1.msra.mxu0 0.0
      %696 = vmatprep.subr.mxu0 0.0
      %697 = vmatpush1.msra.mxu0 0.0
      %698 = vmatprep.subr.mxu0 0.0
      %699 = vmatpush1.msra.mxu0 0.0
      %700 = vmatprep.subr.mxu0 0.0
      %701 = vmatpush1.msra.mxu0 0.0
      %702 = vmatprep.subr.mxu0 0.0
      %703 = vmatpush1.msra.mxu0 0.0
      %704 = vmatprep.subr.mxu0 0.0
      %705 = vmatpush1.msra.mxu0 0.0
      %706 = vmatprep.subr.mxu0 0.0
      %707 = vmatpush1.msra.mxu0 0.0
      %708 = vmatprep.subr.mxu0 0.0
      %709 = vmatpush1.msra.mxu0 0.0
      %710 = vmatprep.subr.mxu0 0.0
      %711 = vmatpush1.msra.mxu0 0.0
      %712 = vmatprep.subr.mxu0 0.0
      %713 = vmatpush1.msra.mxu0 0.0
      %714 = vmatprep.subr.mxu0 0.0
      %715 = vmatpush1.msra.mxu0 0.0
      %716 = vmatprep.mubr.f32.mxu0 0.0
      %717 = vmatmul.mubr.f32.gmra.mrb[0].mxu0 %v644
      %v718 = vpop.f32.mrb[0].mxu0
      %v719 = vadd.f32 0.0, %v718
      %v720 = vpop.f32.mrb[0].mxu0
      %721 = vmatprep.mubr.f32.mxu0 0.0
      %722 = vmatmul.mubr.f32.gmra.mrb[0].mxu0 %v647
      %v723 = vpop.f32.mrb[0].mxu0
      %v724 = vadd.f32 0.0, %v723
      %v725 = vpop.f32.mrb[0].mxu0
      %726 = vdwg.mxu0
      %v727 = vadd.f32 %v641, %v719
      %v728 = vadd.f32 %v642, %v724
      %v729 = vld [vmem:[%s5 + $0x8] sm:$0xf]
      %v730 = vld [vmem:[%s5 + $0xc] sm:$0xf]
      %v731 = vunpack.c.l.bf16 %v729
      %v732 = vunpack.c.l.bf16 %v730
      %v733 = vld [vmem:[%s4 + $0x3] sm:$0x1]
      %v734 = vlaneseq
      %v735 = vshrl.u32 %v734, 7
      %v736 = vsub.s32 0, %v735
      %v737 = vrot.slane %v733, %v736
      %v739 = vsel %vm409, %v727, 0
      %v742 = vsel %vm409, %v728, 0
      %744 = vmatprep.subr.mxu0 0.0
      %745 = vmatpush1.msra.mxu0 %v731
      %746 = vmatprep.subr.mxu0 0.0
      %747 = vmatpush1.msra.mxu0 %v732
      %748 = vmatprep.subr.mxu0 0.0
      %749 = vmatpush1.msra.mxu0 0.0
      %750 = vmatprep.subr.mxu0 0.0
      %751 = vmatpush1.msra.mxu0 0.0
      %752 = vmatprep.subr.mxu0 0.0
      %753 = vmatpush1.msra.mxu0 0.0
      %754 = vmatprep.subr.mxu0 0.0
      %755 = vmatpush1.msra.mxu0 0.0
      %756 = vmatprep.subr.mxu0 0.0
      %757 = vmatpush1.msra.mxu0 0.0
      %758 = vmatprep.subr.mxu0 0.0
      %759 = vmatpush1.msra.mxu0 0.0
      %760 = vmatprep.subr.mxu0 0.0
      %761 = vmatpush1.msra.mxu0 0.0
      %762 = vmatprep.subr.mxu0 0.0
      %763 = vmatpush1.msra.mxu0 0.0
      %764 = vmatprep.subr.mxu0 0.0
      %765 = vmatpush1.msra.mxu0 0.0
      %766 = vmatprep.subr.mxu0 0.0
      %767 = vmatpush1.msra.mxu0 0.0
      %768 = vmatprep.subr.mxu0 0.0
      %769 = vmatpush1.msra.mxu0 0.0
      %770 = vmatprep.subr.mxu0 0.0
      %771 = vmatpush1.msra.mxu0 0.0
      %772 = vmatprep.subr.mxu0 0.0
      %773 = vmatpush1.msra.mxu0 0.0
      %774 = vmatprep.subr.mxu0 0.0
      %775 = vmatpush1.msra.mxu0 0.0
      %776 = vmatprep.subr.mxu0 0.0
      %777 = vmatpush1.msra.mxu0 0.0
      %778 = vmatprep.subr.mxu0 0.0
      %779 = vmatpush1.msra.mxu0 0.0
      %780 = vmatprep.subr.mxu0 0.0
      %781 = vmatpush1.msra.mxu0 0.0
      %782 = vmatprep.subr.mxu0 0.0
      %783 = vmatpush1.msra.mxu0 0.0
      %784 = vmatprep.subr.mxu0 0.0
      %785 = vmatpush1.msra.mxu0 0.0
      %786 = vmatprep.subr.mxu0 0.0
      %787 = vmatpush1.msra.mxu0 0.0
      %788 = vmatprep.subr.mxu0 0.0
      %789 = vmatpush1.msra.mxu0 0.0
      %790 = vmatprep.subr.mxu0 0.0
      %791 = vmatpush1.msra.mxu0 0.0
      %792 = vmatprep.subr.mxu0 0.0
      %793 = vmatpush1.msra.mxu0 0.0
      %794 = vmatprep.subr.mxu0 0.0
      %795 = vmatpush1.msra.mxu0 0.0
      %796 = vmatprep.subr.mxu0 0.0
      %797 = vmatpush1.msra.mxu0 0.0
      %798 = vmatprep.subr.mxu0 0.0
      %799 = vmatpush1.msra.mxu0 0.0
      %800 = vmatprep.subr.mxu0 0.0
      %801 = vmatpush1.msra.mxu0 0.0
      %802 = vmatprep.subr.mxu0 0.0
      %803 = vmatpush1.msra.mxu0 0.0
      %804 = vmatprep.subr.mxu0 0.0
      %805 = vmatpush1.msra.mxu0 0.0
      %806 = vmatprep.subr.mxu0 0.0
      %807 = vmatpush1.msra.mxu0 0.0
      %808 = vmatprep.mubr.f32.mxu0 0.0
      %809 = vmatmul.mubr.f32.gmra.mrb[0].mxu0 %v739
      %v810 = vpop.f32.mrb[0].mxu0
      %v811 = vadd.f32 %v737, %v810
      %v812 = vpop.f32.mrb[0].mxu0
      %813 = vmatprep.mubr.f32.mxu0 0.0
      %814 = vmatmul.mubr.f32.gmra.mrb[0].mxu0 %v742
      %v815 = vpop.f32.mrb[0].mxu0
      %v816 = vadd.f32 %v737, %v815
      %v817 = vpop.f32.mrb[0].mxu0
      %818 = vdwg.mxu0
      %v819 = vmax.f32 %v811, 0.0
      %v820 = vmax.f32 %v816, 0.0
      %v821 = vld [vmem:[%s5 + $0x10] sm:$0xf]
      %v822 = vld [vmem:[%s5 + $0x14] sm:$0xf]
      %v823 = vunpack.c.l.bf16 %v821
      %v824 = vunpack.c.l.bf16 %v822
      %v825 = vld [vmem:[%s4 + $0x4] sm:$0x1]
      %v826 = vlaneseq
      %v827 = vshrl.u32 %v826, 7
      %v828 = vsub.s32 0, %v827
      %v829 = vrot.slane %v825, %v828
      %v831 = vsel %vm409, %v819, 0
      %v834 = vsel %vm409, %v820, 0
      %836 = vmatprep.subr.mxu0 0.0
      %837 = vmatpush1.msra.mxu0 %v823
      %838 = vmatprep.subr.mxu0 0.0
      %839 = vmatpush1.msra.mxu0 %v824
      %840 = vmatprep.subr.mxu0 0.0
      %841 = vmatpush1.msra.mxu0 0.0
      %842 = vmatprep.subr.mxu0 0.0
      %843 = vmatpush1.msra.mxu0 0.0
      %844 = vmatprep.subr.mxu0 0.0
      %845 = vmatpush1.msra.mxu0 0.0
      %846 = vmatprep.subr.mxu0 0.0
      %847 = vmatpush1.msra.mxu0 0.0
      %848 = vmatprep.subr.mxu0 0.0
      %849 = vmatpush1.msra.mxu0 0.0
      %850 = vmatprep.subr.mxu0 0.0
      %851 = vmatpush1.msra.mxu0 0.0
      %852 = vmatprep.subr.mxu0 0.0
      %853 = vmatpush1.msra.mxu0 0.0
      %854 = vmatprep.subr.mxu0 0.0
      %855 = vmatpush1.msra.mxu0 0.0
      %856 = vmatprep.subr.mxu0 0.0
      %857 = vmatpush1.msra.mxu0 0.0
      %858 = vmatprep.subr.mxu0 0.0
      %859 = vmatpush1.msra.mxu0 0.0
      %860 = vmatprep.subr.mxu0 0.0
      %861 = vmatpush1.msra.mxu0 0.0
      %862 = vmatprep.subr.mxu0 0.0
      %863 = vmatpush1.msra.mxu0 0.0
      %864 = vmatprep.subr.mxu0 0.0
      %865 = vmatpush1.msra.mxu0 0.0
      %866 = vmatprep.subr.mxu0 0.0
      %867 = vmatpush1.msra.mxu0 0.0
      %868 = vmatprep.subr.mxu0 0.0
      %869 = vmatpush1.msra.mxu0 0.0
      %870 = vmatprep.subr.mxu0 0.0
      %871 = vmatpush1.msra.mxu0 0.0
      %872 = vmatprep.subr.mxu0 0.0
      %873 = vmatpush1.msra.mxu0 0.0
      %874 = vmatprep.subr.mxu0 0.0
      %875 = vmatpush1.msra.mxu0 0.0
      %876 = vmatprep.subr.mxu0 0.0
      %877 = vmatpush1.msra.mxu0 0.0
      %878 = vmatprep.subr.mxu0 0.0
      %879 = vmatpush1.msra.mxu0 0.0
      %880 = vmatprep.subr.mxu0 0.0
      %881 = vmatpush1.msra.mxu0 0.0
      %882 = vmatprep.subr.mxu0 0.0
      %883 = vmatpush1.msra.mxu0 0.0
      %884 = vmatprep.subr.mxu0 0.0
      %885 = vmatpush1.msra.mxu0 0.0
      %886 = vmatprep.subr.mxu0 0.0
      %887 = vmatpush1.msra.mxu0 0.0
      %888 = vmatprep.subr.mxu0 0.0
      %889 = vmatpush1.msra.mxu0 0.0
      %890 = vmatprep.subr.mxu0 0.0
      %891 = vmatpush1.msra.mxu0 0.0
      %892 = vmatprep.subr.mxu0 0.0
      %893 = vmatpush1.msra.mxu0 0.0
      %894 = vmatprep.subr.mxu0 0.0
      %895 = vmatpush1.msra.mxu0 0.0
      %896 = vmatprep.subr.mxu0 0.0
      %897 = vmatpush1.msra.mxu0 0.0
      %898 = vmatprep.subr.mxu0 0.0
      %899 = vmatpush1.msra.mxu0 0.0
      %900 = vmatprep.mubr.f32.mxu0 0.0
      %901 = vmatmul.mubr.f32.gmra.mrb[0].mxu0 %v831
      %v902 = vpop.f32.mrb[0].mxu0
      %v903 = vadd.f32 %v829, %v902
      %v904 = vpop.f32.mrb[0].mxu0
      %905 = vmatprep.mubr.f32.mxu0 0.0
      %906 = vmatmul.mubr.f32.gmra.mrb[0].mxu0 %v834
      %v907 = vpop.f32.mrb[0].mxu0
      %v908 = vadd.f32 %v829, %v907
      %v909 = vpop.f32.mrb[0].mxu0
      %910 = vdwg.mxu0
      %v911 = vmax.f32 %v903, 0.0
      %v912 = vmax.f32 %v908, 0.0
      %v914 = vsel %vm543, %v912, 0
      %916 = vmatprep.subr.mxu0 0.0
      %917 = vmatpush1.msra.mxu0 %v911
      %918 = vmatprep.subr.mxu0 0.0
      %919 = vmatpush1.msra.mxu0 %v914
      %920 = vmatprep.subr.mxu0 0.0
      %921 = vmatpush1.msra.mxu0 0.0
      %922 = vmatprep.subr.mxu0 0.0
      %923 = vmatpush1.msra.mxu0 0.0
      %924 = vmatprep.subr.mxu0 0.0
      %925 = vmatpush1.msra.mxu0 0.0
      %926 = vmatprep.subr.mxu0 0.0
      %927 = vmatpush1.msra.mxu0 0.0
      %928 = vmatprep.subr.mxu0 0.0
      %929 = vmatpush1.msra.mxu0 0.0
      %930 = vmatprep.subr.mxu0 0.0
      %931 = vmatpush1.msra.mxu0 0.0
      %932 = vmatprep.subr.mxu0 0.0
      %933 = vmatpush1.msra.mxu0 0.0
      %934 = vmatprep.subr.mxu0 0.0
      %935 = vmatpush1.msra.mxu0 0.0
      %936 = vmatprep.subr.mxu0 0.0
      %937 = vmatpush1.msra.mxu0 0.0
      %938 = vmatprep.subr.mxu0 0.0
      %939 = vmatpush1.msra.mxu0 0.0
      %940 = vmatprep.subr.mxu0 0.0
      %941 = vmatpush1.msra.mxu0 0.0
      %942 = vmatprep.subr.mxu0 0.0
      %943 = vmatpush1.msra.mxu0 0.0
      %944 = vmatprep.subr.mxu0 0.0
      %945 = vmatpush1.msra.mxu0 0.0
      %946 = vmatprep.subr.mxu0 0.0
      %947 = vmatpush1.msra.mxu0 0.0
      %948 = vmatprep.subr.mxu0 0.0
      %949 = vmatpush1.msra.mxu0 0.0
      %950 = vmatprep.subr.mxu0 0.0
      %951 = vmatpush1.msra.mxu0 0.0
      %952 = vmatprep.subr.mxu0 0.0
      %953 = vmatpush1.msra.mxu0 0.0
      %954 = vmatprep.subr.mxu0 0.0
      %955 = vmatpush1.msra.mxu0 0.0
      %956 = vmatprep.subr.mxu0 0.0
      %957 = vmatpush1.msra.mxu0 0.0
      %958 = vmatprep.subr.mxu0 0.0
      %959 = vmatpush1.msra.mxu0 0.0
      %960 = vmatprep.subr.mxu0 0.0
      %961 = vmatpush1.msra.mxu0 0.0
      %962 = vmatprep.subr.mxu0 0.0
      %963 = vmatpush1.msra.mxu0 0.0
      %964 = vmatprep.subr.mxu0 0.0
      %965 = vmatpush1.msra.mxu0 0.0
      %966 = vmatprep.subr.mxu0 0.0
      %967 = vmatpush1.msra.mxu0 0.0
      %968 = vmatprep.subr.mxu0 0.0
      %969 = vmatpush1.msra.mxu0 0.0
      %970 = vmatprep.subr.mxu0 0.0
      %971 = vmatpush1.msra.mxu0 0.0
      %972 = vmatprep.subr.mxu0 0.0
      %973 = vmatpush1.msra.mxu0 0.0
      %974 = vmatprep.subr.mxu0 0.0
      %975 = vmatpush1.msra.mxu0 0.0
      %976 = vmatprep.subr.mxu0 0.0
      %977 = vmatpush1.msra.mxu0 0.0
      %978 = vmatprep.subr.mxu0 0.0
      %979 = vmatpush1.msra.mxu0 0.0
      %980 = vmatprep.mubr.f32.mxu0 0.0
      %981 = vmatmul.mubr.f32.gmra.mrb[0].mxu0 %v644
      %v982 = vpop.f32.mrb[0].mxu0
      %v983 = vadd.f32 0.0, %v982
      %v984 = vpop.f32.mrb[0].mxu0
      %985 = vmatprep.mubr.f32.mxu0 0.0
      %986 = vmatmul.mubr.f32.gmra.mrb[0].mxu0 %v647
      %v987 = vpop.f32.mrb[0].mxu0
      %v988 = vadd.f32 0.0, %v987
      %v989 = vpop.f32.mrb[0].mxu0
      %990 = vdwg.mxu0
      %v991 = vadd.f32 %v911, %v983
      %v992 = vadd.f32 %v912, %v988
      %v993 = vld [vmem:[%s5 + $0x18] sm:$0xf]
      %v994 = vld [vmem:[%s5 + $0x1c] sm:$0xf]
      %v995 = vunpack.c.l.bf16 %v993
      %v996 = vunpack.c.l.bf16 %v994
      %v997 = vld [vmem:[%s4 + $0x5] sm:$0x1]
      %v998 = vlaneseq
      %v999 = vshrl.u32 %v998, 7
      %v1000 = vsub.s32 0, %v999
      %v1001 = vrot.slane %v997, %v1000
      %v1003 = vsel %vm409, %v991, 0
      %v1006 = vsel %vm409, %v992, 0
      %1008 = vmatprep.subr.mxu0 0.0
      %1009 = vmatpush1.msra.mxu0 %v995
      %1010 = vmatprep.subr.mxu0 0.0
      %1011 = vmatpush1.msra.mxu0 %v996
      %1012 = vmatprep.subr.mxu0 0.0
      %1013 = vmatpush1.msra.mxu0 0.0
      %1014 = vmatprep.subr.mxu0 0.0
      %1015 = vmatpush1.msra.mxu0 0.0
      %1016 = vmatprep.subr.mxu0 0.0
      %1017 = vmatpush1.msra.mxu0 0.0
      %1018 = vmatprep.subr.mxu0 0.0
      %1019 = vmatpush1.msra.mxu0 0.0
      %1020 = vmatprep.subr.mxu0 0.0
      %1021 = vmatpush1.msra.mxu0 0.0
      %1022 = vmatprep.subr.mxu0 0.0
      %1023 = vmatpush1.msra.mxu0 0.0
      %1024 = vmatprep.subr.mxu0 0.0
      %1025 = vmatpush1.msra.mxu0 0.0
      %1026 = vmatprep.subr.mxu0 0.0
      %1027 = vmatpush1.msra.mxu0 0.0
      %1028 = vmatprep.subr.mxu0 0.0
      %1029 = vmatpush1.msra.mxu0 0.0
      %1030 = vmatprep.subr.mxu0 0.0
      %1031 = vmatpush1.msra.mxu0 0.0
      %1032 = vmatprep.subr.mxu0 0.0
      %1033 = vmatpush1.msra.mxu0 0.0
      %1034 = vmatprep.subr.mxu0 0.0
      %1035 = vmatpush1.msra.mxu0 0.0
      %1036 = vmatprep.subr.mxu0 0.0
      %1037 = vmatpush1.msra.mxu0 0.0
      %1038 = vmatprep.subr.mxu0 0.0
      %1039 = vmatpush1.msra.mxu0 0.0
      %1040 = vmatprep.subr.mxu0 0.0
      %1041 = vmatpush1.msra.mxu0 0.0
      %1042 = vmatprep.subr.mxu0 0.0
      %1043 = vmatpush1.msra.mxu0 0.0
      %1044 = vmatprep.subr.mxu0 0.0
      %1045 = vmatpush1.msra.mxu0 0.0
      %1046 = vmatprep.subr.mxu0 0.0
      %1047 = vmatpush1.msra.mxu0 0.0
      %1048 = vmatprep.subr.mxu0 0.0
      %1049 = vmatpush1.msra.mxu0 0.0
      %1050 = vmatprep.subr.mxu0 0.0
      %1051 = vmatpush1.msra.mxu0 0.0
      %1052 = vmatprep.subr.mxu0 0.0
      %1053 = vmatpush1.msra.mxu0 0.0
      %1054 = vmatprep.subr.mxu0 0.0
      %1055 = vmatpush1.msra.mxu0 0.0
      %1056 = vmatprep.subr.mxu0 0.0
      %1057 = vmatpush1.msra.mxu0 0.0
      %1058 = vmatprep.subr.mxu0 0.0
      %1059 = vmatpush1.msra.mxu0 0.0
      %1060 = vmatprep.subr.mxu0 0.0
      %1061 = vmatpush1.msra.mxu0 0.0
      %1062 = vmatprep.subr.mxu0 0.0
      %1063 = vmatpush1.msra.mxu0 0.0
      %1064 = vmatprep.subr.mxu0 0.0
      %1065 = vmatpush1.msra.mxu0 0.0
      %1066 = vmatprep.subr.mxu0 0.0
      %1067 = vmatpush1.msra.mxu0 0.0
      %1068 = vmatprep.subr.mxu0 0.0
      %1069 = vmatpush1.msra.mxu0 0.0
      %1070 = vmatprep.subr.mxu0 0.0
      %1071 = vmatpush1.msra.mxu0 0.0
      %1072 = vmatprep.mubr.f32.mxu0 0.0
      %1073 = vmatmul.mubr.f32.gmra.mrb[0].mxu0 %v1003
      %v1074 = vpop.f32.mrb[0].mxu0
      %v1075 = vadd.f32 %v1001, %v1074
      %v1076 = vpop.f32.mrb[0].mxu0
      %1077 = vmatprep.mubr.f32.mxu0 0.0
      %1078 = vmatmul.mubr.f32.gmra.mrb[0].mxu0 %v1006
      %v1079 = vpop.f32.mrb[0].mxu0
      %v1080 = vadd.f32 %v1001, %v1079
      %v1081 = vpop.f32.mrb[0].mxu0
      %1082 = vdwg.mxu0
      %v1083 = vmax.f32 %v1075, 0.0
      %v1084 = vmax.f32 %v1080, 0.0
      %v1085 = vld [vmem:[%s5 + $0x20] sm:$0xf]
      %v1086 = vld [vmem:[%s5 + $0x24] sm:$0xf]
      %v1087 = vunpack.c.l.bf16 %v1085
      %v1088 = vunpack.c.l.bf16 %v1086
      %v1089 = vld [vmem:[%s4 + $0x6] sm:$0x1]
      %v1090 = vlaneseq
      %v1091 = vshrl.u32 %v1090, 7
      %v1092 = vsub.s32 0, %v1091
      %v1093 = vrot.slane %v1089, %v1092
      %v1095 = vsel %vm409, %v1083, 0
      %v1098 = vsel %vm409, %v1084, 0
      %1100 = vmatprep.subr.mxu0 0.0
      %1101 = vmatpush1.msra.mxu0 %v1087
      %1102 = vmatprep.subr.mxu0 0.0
      %1103 = vmatpush1.msra.mxu0 %v1088
      %1104 = vmatprep.subr.mxu0 0.0
      %1105 = vmatpush1.msra.mxu0 0.0
      %1106 = vmatprep.subr.mxu0 0.0
      %1107 = vmatpush1.msra.mxu0 0.0
      %1108 = vmatprep.subr.mxu0 0.0
      %1109 = vmatpush1.msra.mxu0 0.0
      %1110 = vmatprep.subr.mxu0 0.0
      %1111 = vmatpush1.msra.mxu0 0.0
      %1112 = vmatprep.subr.mxu0 0.0
      %1113 = vmatpush1.msra.mxu0 0.0
      %1114 = vmatprep.subr.mxu0 0.0
      %1115 = vmatpush1.msra.mxu0 0.0
      %1116 = vmatprep.subr.mxu0 0.0
      %1117 = vmatpush1.msra.mxu0 0.0
      %1118 = vmatprep.subr.mxu0 0.0
      %1119 = vmatpush1.msra.mxu0 0.0
      %1120 = vmatprep.subr.mxu0 0.0
      %1121 = vmatpush1.msra.mxu0 0.0
      %1122 = vmatprep.subr.mxu0 0.0
      %1123 = vmatpush1.msra.mxu0 0.0
      %1124 = vmatprep.subr.mxu0 0.0
      %1125 = vmatpush1.msra.mxu0 0.0
      %1126 = vmatprep.subr.mxu0 0.0
      %1127 = vmatpush1.msra.mxu0 0.0
      %1128 = vmatprep.subr.mxu0 0.0
      %1129 = vmatpush1.msra.mxu0 0.0
      %1130 = vmatprep.subr.mxu0 0.0
      %1131 = vmatpush1.msra.mxu0 0.0
      %1132 = vmatprep.subr.mxu0 0.0
      %1133 = vmatpush1.msra.mxu0 0.0
      %1134 = vmatprep.subr.mxu0 0.0
      %1135 = vmatpush1.msra.mxu0 0.0
      %1136 = vmatprep.subr.mxu0 0.0
      %1137 = vmatpush1.msra.mxu0 0.0
      %1138 = vmatprep.subr.mxu0 0.0
      %1139 = vmatpush1.msra.mxu0 0.0
      %1140 = vmatprep.subr.mxu0 0.0
      %1141 = vmatpush1.msra.mxu0 0.0
      %1142 = vmatprep.subr.mxu0 0.0
      %1143 = vmatpush1.msra.mxu0 0.0
      %1144 = vmatprep.subr.mxu0 0.0
      %1145 = vmatpush1.msra.mxu0 0.0
      %1146 = vmatprep.subr.mxu0 0.0
      %1147 = vmatpush1.msra.mxu0 0.0
      %1148 = vmatprep.subr.mxu0 0.0
      %1149 = vmatpush1.msra.mxu0 0.0
      %1150 = vmatprep.subr.mxu0 0.0
      %1151 = vmatpush1.msra.mxu0 0.0
      %1152 = vmatprep.subr.mxu0 0.0
      %1153 = vmatpush1.msra.mxu0 0.0
      %1154 = vmatprep.subr.mxu0 0.0
      %1155 = vmatpush1.msra.mxu0 0.0
      %1156 = vmatprep.subr.mxu0 0.0
      %1157 = vmatpush1.msra.mxu0 0.0
      %1158 = vmatprep.subr.mxu0 0.0
      %1159 = vmatpush1.msra.mxu0 0.0
      %1160 = vmatprep.subr.mxu0 0.0
      %1161 = vmatpush1.msra.mxu0 0.0
      %1162 = vmatprep.subr.mxu0 0.0
      %1163 = vmatpush1.msra.mxu0 0.0
      %1164 = vmatprep.mubr.f32.mxu0 0.0
      %1165 = vmatmul.mubr.f32.gmra.mrb[0].mxu0 %v1095
      %v1166 = vpop.f32.mrb[0].mxu0
      %v1167 = vadd.f32 %v1093, %v1166
      %v1168 = vpop.f32.mrb[0].mxu0
      %1169 = vmatprep.mubr.f32.mxu0 0.0
      %1170 = vmatmul.mubr.f32.gmra.mrb[0].mxu0 %v1098
      %v1171 = vpop.f32.mrb[0].mxu0
      %v1172 = vadd.f32 %v1093, %v1171
      %v1173 = vpop.f32.mrb[0].mxu0
      %1174 = vdwg.mxu0
      %v1175 = vmax.f32 %v1167, 0.0
      %v1176 = vmax.f32 %v1172, 0.0
      %1178 = vrot.lane.b32.xlu0 %v911, 16
      %v1179 = vpop.permute.xlu0 %1178
      %1180 = vrot.lane.b32.xlu0 %v912, 16
      %v1181 = vpop.permute.xlu0 %1180
      %1186 = vrot.lane.b32.xlu0 %v1175, 32
      %v1187 = vpop.permute.xlu0 %1186
      %1188 = vrot.lane.b32.xlu0 %v1176, 32
      %v1189 = vpop.permute.xlu0 %1188
      %v1192 = vsel %vm409, %v641, %v1179
      %v1193 = vsel %vm409, %v642, %v1181
      %vm1194 = vcmask 261120
      %v1195 = vsel %vm1194, %v1192, %v1187
      %v1196 = vsel %vm1194, %v1193, %v1189
      %v1197 = vld [vmem:[%s4 + $0x7] sm:$0x1]
      %1198 = vrot.lane.b32.xlu0 %v400, 111
      %v1199 = vpop.permute.xlu0 %1198
      %1200 = vrot.lane.b32.xlu0 %v405, 111
      %v1201 = vpop.permute.xlu0 %1200
      %vm1202 = vcmask 64512
      %v1204 = vsel %vm1202, %v1197, 0
      %v1206 = vsel %vm1202, %v1199, 0
      %v1208 = vsel %vm1202, %v1201, 0
      %1210 = vmatprep.subr.mxu0 0.0
      %1211 = vmatpush1.xpose.msra.mxu0 %v1206
      %1212 = vmatprep.subr.mxu0 0.0
      %1213 = vmatpush1.xpose.msra.mxu0 %v1208
      %1214 = vmatprep.subr.mxu0 0.0
      %1215 = vmatpush1.xpose.msra.mxu0 0.0
      %1216 = vmatprep.subr.mxu0 0.0
      %1217 = vmatpush1.xpose.msra.mxu0 0.0
      %1218 = vmatprep.subr.mxu0 0.0
      %1219 = vmatpush1.xpose.msra.mxu0 0.0
      %1220 = vmatprep.subr.mxu0 0.0
      %1221 = vmatpush1.xpose.msra.mxu0 0.0
      %1222 = vmatprep.subr.mxu0 0.0
      %1223 = vmatpush1.xpose.msra.mxu0 0.0
      %1224 = vmatprep.subr.mxu0 0.0
      %1225 = vmatpush1.xpose.msra.mxu0 0.0
      %1226 = vmatprep.subr.mxu0 0.0
      %1227 = vmatpush1.xpose.msra.mxu0 0.0
      %1228 = vmatprep.subr.mxu0 0.0
      %1229 = vmatpush1.xpose.msra.mxu0 0.0
      %1230 = vmatprep.subr.mxu0 0.0
      %1231 = vmatpush1.xpose.msra.mxu0 0.0
      %1232 = vmatprep.subr.mxu0 0.0
      %1233 = vmatpush1.xpose.msra.mxu0 0.0
      %1234 = vmatprep.subr.mxu0 0.0
      %1235 = vmatpush1.xpose.msra.mxu0 0.0
      %1236 = vmatprep.subr.mxu0 0.0
      %1237 = vmatpush1.xpose.msra.mxu0 0.0
      %1238 = vmatprep.subr.mxu0 0.0
      %1239 = vmatpush1.xpose.msra.mxu0 0.0
      %1240 = vmatprep.subr.mxu0 0.0
      %1241 = vmatpush1.xpose.msra.mxu0 0.0
      %1242 = vmatprep.subr.mxu0 0.0
      %1243 = vmatpush1.xpose.msra.mxu0 0.0
      %1244 = vmatprep.subr.mxu0 0.0
      %1245 = vmatpush1.xpose.msra.mxu0 0.0
      %1246 = vmatprep.subr.mxu0 0.0
      %1247 = vmatpush1.xpose.msra.mxu0 0.0
      %1248 = vmatprep.subr.mxu0 0.0
      %1249 = vmatpush1.xpose.msra.mxu0 0.0
      %1250 = vmatprep.subr.mxu0 0.0
      %1251 = vmatpush1.xpose.msra.mxu0 0.0
      %1252 = vmatprep.subr.mxu0 0.0
      %1253 = vmatpush1.xpose.msra.mxu0 0.0
      %1254 = vmatprep.subr.mxu0 0.0
      %1255 = vmatpush1.xpose.msra.mxu0 0.0
      %1256 = vmatprep.subr.mxu0 0.0
      %1257 = vmatpush1.xpose.msra.mxu0 0.0
      %1258 = vmatprep.subr.mxu0 0.0
      %1259 = vmatpush1.xpose.msra.mxu0 0.0
      %1260 = vmatprep.subr.mxu0 0.0
      %1261 = vmatpush1.xpose.msra.mxu0 0.0
      %1262 = vmatprep.subr.mxu0 0.0
      %1263 = vmatpush1.xpose.msra.mxu0 0.0
      %1264 = vmatprep.subr.mxu0 0.0
      %1265 = vmatpush1.xpose.msra.mxu0 0.0
      %1266 = vmatprep.subr.mxu0 0.0
      %1267 = vmatpush1.xpose.msra.mxu0 0.0
      %1268 = vmatprep.subr.mxu0 0.0
      %1269 = vmatpush1.xpose.msra.mxu0 0.0
      %1270 = vmatprep.subr.mxu0 0.0
      %1271 = vmatpush1.xpose.msra.mxu0 0.0
      %1272 = vmatprep.subr.mxu0 0.0
      %1273 = vmatpush1.xpose.msra.mxu0 0.0
      %1274 = vmatprep.mubr.f32.mxu0 0.0
      %1275 = vmatmul.mubr.f32.gmra.mrb[0].mxu0 %v1204
      %v1276 = vpop.f32.mrb[0].mxu0
      %v1277 = vadd.f32 0.0, %v1276
      %v1278 = vpop.f32.mrb[0].mxu0
      %1279 = vdwg.mxu0
      %1280 = vset.pattern.permute.xlu0 25
      %1281 = vperm.xlu0 %1280, %v400
      %v1282 = vpop.permute.xlu0 %1281
      %1284 = vset.pattern.permute.xlu0 25
      %1285 = vperm.xlu0 %1284, %v405
      %v1286 = vpop.permute.xlu0 %1285
      %v1288 = vlaneseq
      %v1289 = vshrl.u32 %v1288, 7
      %v1290 = vsub.s32 0, %v1289
      %v1291 = vrot.slane %v1277, %v1290
      %v1292 = vadd.f32 %v1282, %v1291
      %v1293 = vadd.f32 %v1286, %v1291
      %vm1294 = vcmp.gt.f32.partialorder %v1292, 0.0
      %vm1295 = vcmp.gt.f32.partialorder %v1293, 0.0
      %v1296 = vmul.f32 %v1292, 0.2
      %v1297 = vmul.f32 %v1293, 0.2
      %v1298 = vsel %vm1294, %v1292, %v1296
      %v1299 = vsel %vm1295, %v1293, %v1297
      %vm1300 = vcmp.gt.f32.partialorder %v314, 0.0
      %vm1301 = vcmp.gt.f32.partialorder %v315, 0.0
      %v1302 = vsel %vm1300, %v1298, -1e+30
      %v1303 = vsel %vm1301, %v1299, -1e+30
      %v1304 = vsel %vm513, %v1302, -inf
      %1305 = vmax.xlane.f32.xlu0 %v1304
      %v1306 = vpop.xlane.xlu0 %1305
      %v1307 = vsel %vm517, %v1303, -inf
      %1308 = vmax.xlane.f32.xlu0 %v1307
      %v1309 = vpop.xlane.xlu0 %1308
      %v1310 = vsub.f32 %v1302, %v1306
      %v1311 = vsub.f32 %v1303, %v1309
      %v1312 = vmin.f32 %v1310, 0.0
      %v1313 = vmin.f32 %v1311, 0.0
      %v1314 = vmul.f32 %v1312, 1.442695
      %v1315 = vpow.pop %v1314
      %v1316 = vmul.f32 %v1313, 1.442695
      %v1317 = vpow.pop %v1316
      %v1318 = vsel %vm1300, %v1315, 0.0
      %v1319 = vsel %vm1301, %v1317, 0.0
      %v1320 = vsel %vm513, %v1318, 0.0
      %1321 = vadd.xlane.f32.xlu0 %v1320
      %v1322 = vpop.xlane.xlu0 %1321
      %v1323 = vsel %vm517, %v1319, 0.0
      %1324 = vadd.xlane.f32.xlu0 %v1323
      %v1325 = vpop.xlane.xlu0 %1324
      %v1328 = vsel %vm513, %v1318, 0
      %v1331 = vsel %vm513, %v1319, 0
      %v1333 = vsel %vm543, %v1201, 0
      %1335 = vmatprep.subr.mxu0 0.0
      %1336 = vmatpush1.msra.mxu0 %v1199
      %1337 = vmatprep.subr.mxu0 0.0
      %1338 = vmatpush1.msra.mxu0 %v1333
      %1339 = vmatprep.subr.mxu0 0.0
      %1340 = vmatpush1.msra.mxu0 0.0
      %1341 = vmatprep.subr.mxu0 0.0
      %1342 = vmatpush1.msra.mxu0 0.0
      %1343 = vmatprep.subr.mxu0 0.0
      %1344 = vmatpush1.msra.mxu0 0.0
      %1345 = vmatprep.subr.mxu0 0.0
      %1346 = vmatpush1.msra.mxu0 0.0
      %1347 = vmatprep.subr.mxu0 0.0
      %1348 = vmatpush1.msra.mxu0 0.0
      %1349 = vmatprep.subr.mxu0 0.0
      %1350 = vmatpush1.msra.mxu0 0.0
      %1351 = vmatprep.subr.mxu0 0.0
      %1352 = vmatpush1.msra.mxu0 0.0
      %1353 = vmatprep.subr.mxu0 0.0
      %1354 = vmatpush1.msra.mxu0 0.0
      %1355 = vmatprep.subr.mxu0 0.0
      %1356 = vmatpush1.msra.mxu0 0.0
      %1357 = vmatprep.subr.mxu0 0.0
      %1358 = vmatpush1.msra.mxu0 0.0
      %1359 = vmatprep.subr.mxu0 0.0
      %1360 = vmatpush1.msra.mxu0 0.0
      %1361 = vmatprep.subr.mxu0 0.0
      %1362 = vmatpush1.msra.mxu0 0.0
      %1363 = vmatprep.subr.mxu0 0.0
      %1364 = vmatpush1.msra.mxu0 0.0
      %1365 = vmatprep.subr.mxu0 0.0
      %1366 = vmatpush1.msra.mxu0 0.0
      %1367 = vmatprep.subr.mxu0 0.0
      %1368 = vmatpush1.msra.mxu0 0.0
      %1369 = vmatprep.subr.mxu0 0.0
      %1370 = vmatpush1.msra.mxu0 0.0
      %1371 = vmatprep.subr.mxu0 0.0
      %1372 = vmatpush1.msra.mxu0 0.0
      %1373 = vmatprep.subr.mxu0 0.0
      %1374 = vmatpush1.msra.mxu0 0.0
      %1375 = vmatprep.subr.mxu0 0.0
      %1376 = vmatpush1.msra.mxu0 0.0
      %1377 = vmatprep.subr.mxu0 0.0
      %1378 = vmatpush1.msra.mxu0 0.0
      %1379 = vmatprep.subr.mxu0 0.0
      %1380 = vmatpush1.msra.mxu0 0.0
      %1381 = vmatprep.subr.mxu0 0.0
      %1382 = vmatpush1.msra.mxu0 0.0
      %1383 = vmatprep.subr.mxu0 0.0
      %1384 = vmatpush1.msra.mxu0 0.0
      %1385 = vmatprep.subr.mxu0 0.0
      %1386 = vmatpush1.msra.mxu0 0.0
      %1387 = vmatprep.subr.mxu0 0.0
      %1388 = vmatpush1.msra.mxu0 0.0
      %1389 = vmatprep.subr.mxu0 0.0
      %1390 = vmatpush1.msra.mxu0 0.0
      %1391 = vmatprep.subr.mxu0 0.0
      %1392 = vmatpush1.msra.mxu0 0.0
      %1393 = vmatprep.subr.mxu0 0.0
      %1394 = vmatpush1.msra.mxu0 0.0
      %1395 = vmatprep.subr.mxu0 0.0
      %1396 = vmatpush1.msra.mxu0 0.0
      %1397 = vmatprep.subr.mxu0 0.0
      %1398 = vmatpush1.msra.mxu0 0.0
      %1399 = vmatprep.mubr.f32.mxu0 0.0
      %1400 = vmatmul.mubr.f32.gmra.mrb[0].mxu0 %v1328
      %v1401 = vpop.f32.mrb[0].mxu0
      %v1402 = vadd.f32 0.0, %v1401
      %v1403 = vpop.f32.mrb[0].mxu0
      %1404 = vmatprep.mubr.f32.mxu0 0.0
      %1405 = vmatmul.mubr.f32.gmra.mrb[0].mxu0 %v1331
      %v1406 = vpop.f32.mrb[0].mxu0
      %v1407 = vadd.f32 0.0, %v1406
      %v1408 = vpop.f32.mrb[0].mxu0
      %1409 = vdwg.mxu0
      %v1410 = vmax.f32 %v1322, 1e-16
      %v1411 = vmax.f32 %v1325, 1e-16
      %v1412 = vrcp.pop %v1410
      %v1413 = vrcp.pop %v1411
      %v1414 = vmul.f32 %v1402, %v1412
      %v1415 = vmul.f32 %v1407, %v1413
      %v1416 = vld [vmem:[%s4 + $0x8] sm:$0x1]
      %v1417 = vlaneseq
      %v1418 = vshrl.u32 %v1417, 7
      %v1419 = vsub.s32 0, %v1418
      %v1420 = vrot.slane %v1416, %v1419
      %v1421 = vmul.f32 %v1414, %v1420
      %v1422 = vmul.f32 %v1415, %v1420
      %v1423 = vld [vmem:[%s4 + $0x9] sm:$0x1]
      %v1424 = vlaneseq
      %v1425 = vshrl.u32 %v1424, 7
      %v1426 = vsub.s32 0, %v1425
      %v1427 = vrot.slane %v1423, %v1426
      %v1428 = vadd.f32 %v1421, %v1427
      %v1429 = vadd.f32 %v1422, %v1427
      %v1430 = vmax.f32 %v1428, 0.0
      %v1431 = vmax.f32 %v1429, 0.0
      %v1433 = vsel %vm513, %v314, 0
      %v1436 = vsel %vm513, %v315, 0
      %v1439 = vsel %vm543, %v1431, 0
      %1441 = vmatprep.subr.mxu0 0.0
      %1442 = vmatpush1.msra.mxu0 %v1430
      %1443 = vmatprep.subr.mxu0 0.0
      %1444 = vmatpush1.msra.mxu0 %v1439
      %1445 = vmatprep.subr.mxu0 0.0
      %1446 = vmatpush1.msra.mxu0 0.0
      %1447 = vmatprep.subr.mxu0 0.0
      %1448 = vmatpush1.msra.mxu0 0.0
      %1449 = vmatprep.subr.mxu0 0.0
      %1450 = vmatpush1.msra.mxu0 0.0
      %1451 = vmatprep.subr.mxu0 0.0
      %1452 = vmatpush1.msra.mxu0 0.0
      %1453 = vmatprep.subr.mxu0 0.0
      %1454 = vmatpush1.msra.mxu0 0.0
      %1455 = vmatprep.subr.mxu0 0.0
      %1456 = vmatpush1.msra.mxu0 0.0
      %1457 = vmatprep.subr.mxu0 0.0
      %1458 = vmatpush1.msra.mxu0 0.0
      %1459 = vmatprep.subr.mxu0 0.0
      %1460 = vmatpush1.msra.mxu0 0.0
      %1461 = vmatprep.subr.mxu0 0.0
      %1462 = vmatpush1.msra.mxu0 0.0
      %1463 = vmatprep.subr.mxu0 0.0
      %1464 = vmatpush1.msra.mxu0 0.0
      %1465 = vmatprep.subr.mxu0 0.0
      %1466 = vmatpush1.msra.mxu0 0.0
      %1467 = vmatprep.subr.mxu0 0.0
      %1468 = vmatpush1.msra.mxu0 0.0
      %1469 = vmatprep.subr.mxu0 0.0
      %1470 = vmatpush1.msra.mxu0 0.0
      %1471 = vmatprep.subr.mxu0 0.0
      %1472 = vmatpush1.msra.mxu0 0.0
      %1473 = vmatprep.subr.mxu0 0.0
      %1474 = vmatpush1.msra.mxu0 0.0
      %1475 = vmatprep.subr.mxu0 0.0
      %1476 = vmatpush1.msra.mxu0 0.0
      %1477 = vmatprep.subr.mxu0 0.0
      %1478 = vmatpush1.msra.mxu0 0.0
      %1479 = vmatprep.subr.mxu0 0.0
      %1480 = vmatpush1.msra.mxu0 0.0
      %1481 = vmatprep.subr.mxu0 0.0
      %1482 = vmatpush1.msra.mxu0 0.0
      %1483 = vmatprep.subr.mxu0 0.0
      %1484 = vmatpush1.msra.mxu0 0.0
      %1485 = vmatprep.subr.mxu0 0.0
      %1486 = vmatpush1.msra.mxu0 0.0
      %1487 = vmatprep.subr.mxu0 0.0
      %1488 = vmatpush1.msra.mxu0 0.0
      %1489 = vmatprep.subr.mxu0 0.0
      %1490 = vmatpush1.msra.mxu0 0.0
      %1491 = vmatprep.subr.mxu0 0.0
      %1492 = vmatpush1.msra.mxu0 0.0
      %1493 = vmatprep.subr.mxu0 0.0
      %1494 = vmatpush1.msra.mxu0 0.0
      %1495 = vmatprep.subr.mxu0 0.0
      %1496 = vmatpush1.msra.mxu0 0.0
      %1497 = vmatprep.subr.mxu0 0.0
      %1498 = vmatpush1.msra.mxu0 0.0
      %1499 = vmatprep.subr.mxu0 0.0
      %1500 = vmatpush1.msra.mxu0 0.0
      %1501 = vmatprep.subr.mxu0 0.0
      %1502 = vmatpush1.msra.mxu0 0.0
      %1503 = vmatprep.subr.mxu0 0.0
      %1504 = vmatpush1.msra.mxu0 0.0
      %1505 = vmatprep.mubr.f32.mxu0 0.0
      %1506 = vmatmul.mubr.f32.gmra.mrb[0].mxu0 %v1433
      %v1507 = vpop.f32.mrb[0].mxu0
      %v1508 = vadd.f32 0.0, %v1507
      %v1509 = vpop.f32.mrb[0].mxu0
      %1510 = vmatprep.mubr.f32.mxu0 0.0
      %1511 = vmatmul.mubr.f32.gmra.mrb[0].mxu0 %v1436
      %v1512 = vpop.f32.mrb[0].mxu0
      %v1513 = vadd.f32 0.0, %v1512
      %v1514 = vpop.f32.mrb[0].mxu0
      %1515 = vdwg.mxu0
      %v1516 = vadd.f32 %v1430, %v1508
      %v1517 = vadd.f32 %v1431, %v1513
      %v1518 = vld [vmem:[%s5 + $0x28] sm:$0xf]
      %v1519 = vunpack.c.l.bf16 %v1518
      %v1520 = vld [vmem:[%s4 + $0xa] sm:$0x1]
      %v1521 = vlaneseq
      %v1522 = vshrl.u32 %v1521, 7
      %v1523 = vsub.s32 0, %v1522
      %v1524 = vrot.slane %v1520, %v1523
      %v1526 = vsel %vm1202, %v1516, 0
      %v1529 = vsel %vm1202, %v1517, 0
      %1531 = vmatprep.subr.mxu0 0.0
      %1532 = vmatpush1.msra.mxu0 %v1519
      %1533 = vmatprep.subr.mxu0 0.0
      %1534 = vmatpush1.msra.mxu0 0.0
      %1535 = vmatprep.subr.mxu0 0.0
      %1536 = vmatpush1.msra.mxu0 0.0
      %1537 = vmatprep.subr.mxu0 0.0
      %1538 = vmatpush1.msra.mxu0 0.0
      %1539 = vmatprep.subr.mxu0 0.0
      %1540 = vmatpush1.msra.mxu0 0.0
      %1541 = vmatprep.subr.mxu0 0.0
      %1542 = vmatpush1.msra.mxu0 0.0
      %1543 = vmatprep.subr.mxu0 0.0
      %1544 = vmatpush1.msra.mxu0 0.0
      %1545 = vmatprep.subr.mxu0 0.0
      %1546 = vmatpush1.msra.mxu0 0.0
      %1547 = vmatprep.subr.mxu0 0.0
      %1548 = vmatpush1.msra.mxu0 0.0
      %1549 = vmatprep.subr.mxu0 0.0
      %1550 = vmatpush1.msra.mxu0 0.0
      %1551 = vmatprep.subr.mxu0 0.0
      %1552 = vmatpush1.msra.mxu0 0.0
      %1553 = vmatprep.subr.mxu0 0.0
      %1554 = vmatpush1.msra.mxu0 0.0
      %1555 = vmatprep.subr.mxu0 0.0
      %1556 = vmatpush1.msra.mxu0 0.0
      %1557 = vmatprep.subr.mxu0 0.0
      %1558 = vmatpush1.msra.mxu0 0.0
      %1559 = vmatprep.subr.mxu0 0.0
      %1560 = vmatpush1.msra.mxu0 0.0
      %1561 = vmatprep.subr.mxu0 0.0
      %1562 = vmatpush1.msra.mxu0 0.0
      %1563 = vmatprep.subr.mxu0 0.0
      %1564 = vmatpush1.msra.mxu0 0.0
      %1565 = vmatprep.subr.mxu0 0.0
      %1566 = vmatpush1.msra.mxu0 0.0
      %1567 = vmatprep.subr.mxu0 0.0
      %1568 = vmatpush1.msra.mxu0 0.0
      %1569 = vmatprep.subr.mxu0 0.0
      %1570 = vmatpush1.msra.mxu0 0.0
      %1571 = vmatprep.subr.mxu0 0.0
      %1572 = vmatpush1.msra.mxu0 0.0
      %1573 = vmatprep.subr.mxu0 0.0
      %1574 = vmatpush1.msra.mxu0 0.0
      %1575 = vmatprep.subr.mxu0 0.0
      %1576 = vmatpush1.msra.mxu0 0.0
      %1577 = vmatprep.subr.mxu0 0.0
      %1578 = vmatpush1.msra.mxu0 0.0
      %1579 = vmatprep.subr.mxu0 0.0
      %1580 = vmatpush1.msra.mxu0 0.0
      %1581 = vmatprep.subr.mxu0 0.0
      %1582 = vmatpush1.msra.mxu0 0.0
      %1583 = vmatprep.subr.mxu0 0.0
      %1584 = vmatpush1.msra.mxu0 0.0
      %1585 = vmatprep.subr.mxu0 0.0
      %1586 = vmatpush1.msra.mxu0 0.0
      %1587 = vmatprep.subr.mxu0 0.0
      %1588 = vmatpush1.msra.mxu0 0.0
      %1589 = vmatprep.subr.mxu0 0.0
      %1590 = vmatpush1.msra.mxu0 0.0
      %1591 = vmatprep.subr.mxu0 0.0
      %1592 = vmatpush1.msra.mxu0 0.0
      %1593 = vmatprep.subr.mxu0 0.0
      %1594 = vmatpush1.msra.mxu0 0.0
      %1595 = vmatprep.mubr.f32.mxu0 0.0
      %1596 = vmatmul.mubr.f32.gmra.mrb[0].mxu0 %v1526
      %v1597 = vpop.f32.mrb[0].mxu0
      %v1598 = vadd.f32 %v1524, %v1597
      %v1599 = vpop.f32.mrb[0].mxu0
      %1600 = vmatprep.mubr.f32.mxu0 0.0
      %1601 = vmatmul.mubr.f32.gmra.mrb[0].mxu0 %v1529
      %v1602 = vpop.f32.mrb[0].mxu0
      %v1603 = vadd.f32 %v1524, %v1602
      %v1604 = vpop.f32.mrb[0].mxu0
      %1605 = vdwg.mxu0
      %v1606 = vmax.f32 %v1598, 0.0
      %v1607 = vmax.f32 %v1603, 0.0
      %v1608 = vld [vmem:[%s5 + $0x2c] sm:$0xf]
      %v1609 = vunpack.c.l.bf16 %v1608
      %v1610 = vld [vmem:[%s4 + $0xb] sm:$0x1]
      %v1611 = vlaneseq
      %v1612 = vshrl.u32 %v1611, 7
      %v1613 = vsub.s32 0, %v1612
      %v1614 = vrot.slane %v1610, %v1613
      %v1616 = vsel %vm1202, %v1606, 0
      %v1619 = vsel %vm1202, %v1607, 0
      %1621 = vmatprep.subr.mxu0 0.0
      %1622 = vmatpush1.msra.mxu0 %v1609
      %1623 = vmatprep.subr.mxu0 0.0
      %1624 = vmatpush1.msra.mxu0 0.0
      %1625 = vmatprep.subr.mxu0 0.0
      %1626 = vmatpush1.msra.mxu0 0.0
      %1627 = vmatprep.subr.mxu0 0.0
      %1628 = vmatpush1.msra.mxu0 0.0
      %1629 = vmatprep.subr.mxu0 0.0
      %1630 = vmatpush1.msra.mxu0 0.0
      %1631 = vmatprep.subr.mxu0 0.0
      %1632 = vmatpush1.msra.mxu0 0.0
      %1633 = vmatprep.subr.mxu0 0.0
      %1634 = vmatpush1.msra.mxu0 0.0
      %1635 = vmatprep.subr.mxu0 0.0
      %1636 = vmatpush1.msra.mxu0 0.0
      %1637 = vmatprep.subr.mxu0 0.0
      %1638 = vmatpush1.msra.mxu0 0.0
      %1639 = vmatprep.subr.mxu0 0.0
      %1640 = vmatpush1.msra.mxu0 0.0
      %1641 = vmatprep.subr.mxu0 0.0
      %1642 = vmatpush1.msra.mxu0 0.0
      %1643 = vmatprep.subr.mxu0 0.0
      %1644 = vmatpush1.msra.mxu0 0.0
      %1645 = vmatprep.subr.mxu0 0.0
      %1646 = vmatpush1.msra.mxu0 0.0
      %1647 = vmatprep.subr.mxu0 0.0
      %1648 = vmatpush1.msra.mxu0 0.0
      %1649 = vmatprep.subr.mxu0 0.0
      %1650 = vmatpush1.msra.mxu0 0.0
      %1651 = vmatprep.subr.mxu0 0.0
      %1652 = vmatpush1.msra.mxu0 0.0
      %1653 = vmatprep.subr.mxu0 0.0
      %1654 = vmatpush1.msra.mxu0 0.0
      %1655 = vmatprep.subr.mxu0 0.0
      %1656 = vmatpush1.msra.mxu0 0.0
      %1657 = vmatprep.subr.mxu0 0.0
      %1658 = vmatpush1.msra.mxu0 0.0
      %1659 = vmatprep.subr.mxu0 0.0
      %1660 = vmatpush1.msra.mxu0 0.0
      %1661 = vmatprep.subr.mxu0 0.0
      %1662 = vmatpush1.msra.mxu0 0.0
      %1663 = vmatprep.subr.mxu0 0.0
      %1664 = vmatpush1.msra.mxu0 0.0
      %1665 = vmatprep.subr.mxu0 0.0
      %1666 = vmatpush1.msra.mxu0 0.0
      %1667 = vmatprep.subr.mxu0 0.0
      %1668 = vmatpush1.msra.mxu0 0.0
      %1669 = vmatprep.subr.mxu0 0.0
      %1670 = vmatpush1.msra.mxu0 0.0
      %1671 = vmatprep.subr.mxu0 0.0
      %1672 = vmatpush1.msra.mxu0 0.0
      %1673 = vmatprep.subr.mxu0 0.0
      %1674 = vmatpush1.msra.mxu0 0.0
      %1675 = vmatprep.subr.mxu0 0.0
      %1676 = vmatpush1.msra.mxu0 0.0
      %1677 = vmatprep.subr.mxu0 0.0
      %1678 = vmatpush1.msra.mxu0 0.0
      %1679 = vmatprep.subr.mxu0 0.0
      %1680 = vmatpush1.msra.mxu0 0.0
      %1681 = vmatprep.subr.mxu0 0.0
      %1682 = vmatpush1.msra.mxu0 0.0
      %1683 = vmatprep.subr.mxu0 0.0
      %1684 = vmatpush1.msra.mxu0 0.0
      %1685 = vmatprep.mubr.f32.mxu0 0.0
      %1686 = vmatmul.mubr.f32.gmra.mrb[0].mxu0 %v1616
      %v1687 = vpop.f32.mrb[0].mxu0
      %v1688 = vadd.f32 %v1614, %v1687
      %v1689 = vpop.f32.mrb[0].mxu0
      %1690 = vmatprep.mubr.f32.mxu0 0.0
      %1691 = vmatmul.mubr.f32.gmra.mrb[0].mxu0 %v1619
      %v1692 = vpop.f32.mrb[0].mxu0
      %v1693 = vadd.f32 %v1614, %v1692
      %v1694 = vpop.f32.mrb[0].mxu0
      %1695 = vdwg.mxu0
      %v1696 = vmax.f32 %v1688, 0.0
      %v1697 = vmax.f32 %v1693, 0.0
      %v1699 = vsel %vm543, %v1697, 0
      %1701 = vmatprep.subr.mxu0 0.0
      %1702 = vmatpush1.msra.mxu0 %v1696
      %1703 = vmatprep.subr.mxu0 0.0
      %1704 = vmatpush1.msra.mxu0 %v1699
      %1705 = vmatprep.subr.mxu0 0.0
      %1706 = vmatpush1.msra.mxu0 0.0
      %1707 = vmatprep.subr.mxu0 0.0
      %1708 = vmatpush1.msra.mxu0 0.0
      %1709 = vmatprep.subr.mxu0 0.0
      %1710 = vmatpush1.msra.mxu0 0.0
      %1711 = vmatprep.subr.mxu0 0.0
      %1712 = vmatpush1.msra.mxu0 0.0
      %1713 = vmatprep.subr.mxu0 0.0
      %1714 = vmatpush1.msra.mxu0 0.0
      %1715 = vmatprep.subr.mxu0 0.0
      %1716 = vmatpush1.msra.mxu0 0.0
      %1717 = vmatprep.subr.mxu0 0.0
      %1718 = vmatpush1.msra.mxu0 0.0
      %1719 = vmatprep.subr.mxu0 0.0
      %1720 = vmatpush1.msra.mxu0 0.0
      %1721 = vmatprep.subr.mxu0 0.0
      %1722 = vmatpush1.msra.mxu0 0.0
      %1723 = vmatprep.subr.mxu0 0.0
      %1724 = vmatpush1.msra.mxu0 0.0
      %1725 = vmatprep.subr.mxu0 0.0
      %1726 = vmatpush1.msra.mxu0 0.0
      %1727 = vmatprep.subr.mxu0 0.0
      %1728 = vmatpush1.msra.mxu0 0.0
      %1729 = vmatprep.subr.mxu0 0.0
      %1730 = vmatpush1.msra.mxu0 0.0
      %1731 = vmatprep.subr.mxu0 0.0
      %1732 = vmatpush1.msra.mxu0 0.0
      %1733 = vmatprep.subr.mxu0 0.0
      %1734 = vmatpush1.msra.mxu0 0.0
      %1735 = vmatprep.subr.mxu0 0.0
      %1736 = vmatpush1.msra.mxu0 0.0
      %1737 = vmatprep.subr.mxu0 0.0
      %1738 = vmatpush1.msra.mxu0 0.0
      %1739 = vmatprep.subr.mxu0 0.0
      %1740 = vmatpush1.msra.mxu0 0.0
      %1741 = vmatprep.subr.mxu0 0.0
      %1742 = vmatpush1.msra.mxu0 0.0
      %1743 = vmatprep.subr.mxu0 0.0
      %1744 = vmatpush1.msra.mxu0 0.0
      %1745 = vmatprep.subr.mxu0 0.0
      %1746 = vmatpush1.msra.mxu0 0.0
      %1747 = vmatprep.subr.mxu0 0.0
      %1748 = vmatpush1.msra.mxu0 0.0
      %1749 = vmatprep.subr.mxu0 0.0
      %1750 = vmatpush1.msra.mxu0 0.0
      %1751 = vmatprep.subr.mxu0 0.0
      %1752 = vmatpush1.msra.mxu0 0.0
      %1753 = vmatprep.subr.mxu0 0.0
      %1754 = vmatpush1.msra.mxu0 0.0
      %1755 = vmatprep.subr.mxu0 0.0
      %1756 = vmatpush1.msra.mxu0 0.0
      %1757 = vmatprep.subr.mxu0 0.0
      %1758 = vmatpush1.msra.mxu0 0.0
      %1759 = vmatprep.subr.mxu0 0.0
      %1760 = vmatpush1.msra.mxu0 0.0
      %1761 = vmatprep.subr.mxu0 0.0
      %1762 = vmatpush1.msra.mxu0 0.0
      %1763 = vmatprep.subr.mxu0 0.0
      %1764 = vmatpush1.msra.mxu0 0.0
      %1765 = vmatprep.mubr.f32.mxu0 0.0
      %1766 = vmatmul.mubr.f32.gmra.mrb[0].mxu0 %v1433
      %v1767 = vpop.f32.mrb[0].mxu0
      %v1768 = vadd.f32 0.0, %v1767
      %v1769 = vpop.f32.mrb[0].mxu0
      %1770 = vmatprep.mubr.f32.mxu0 0.0
      %1771 = vmatmul.mubr.f32.gmra.mrb[0].mxu0 %v1436
      %v1772 = vpop.f32.mrb[0].mxu0
      %v1773 = vadd.f32 0.0, %v1772
      %v1774 = vpop.f32.mrb[0].mxu0
      %1775 = vdwg.mxu0
      %v1776 = vadd.f32 %v1696, %v1768
      %v1777 = vadd.f32 %v1697, %v1773
      %v1778 = vld [vmem:[%s5 + $0x30] sm:$0xf]
      %v1779 = vunpack.c.l.bf16 %v1778
      %v1780 = vld [vmem:[%s4 + $0xc] sm:$0x1]
      %v1781 = vlaneseq
      %v1782 = vshrl.u32 %v1781, 7
      %v1783 = vsub.s32 0, %v1782
      %v1784 = vrot.slane %v1780, %v1783
      %v1786 = vsel %vm1202, %v1776, 0
      %v1789 = vsel %vm1202, %v1777, 0
      %1791 = vmatprep.subr.mxu0 0.0
      %1792 = vmatpush1.msra.mxu0 %v1779
      %1793 = vmatprep.subr.mxu0 0.0
      %1794 = vmatpush1.msra.mxu0 0.0
      %1795 = vmatprep.subr.mxu0 0.0
      %1796 = vmatpush1.msra.mxu0 0.0
      %1797 = vmatprep.subr.mxu0 0.0
      %1798 = vmatpush1.msra.mxu0 0.0
      %1799 = vmatprep.subr.mxu0 0.0
      %1800 = vmatpush1.msra.mxu0 0.0
      %1801 = vmatprep.subr.mxu0 0.0
      %1802 = vmatpush1.msra.mxu0 0.0
      %1803 = vmatprep.subr.mxu0 0.0
      %1804 = vmatpush1.msra.mxu0 0.0
      %1805 = vmatprep.subr.mxu0 0.0
      %1806 = vmatpush1.msra.mxu0 0.0
      %1807 = vmatprep.subr.mxu0 0.0
      %1808 = vmatpush1.msra.mxu0 0.0
      %1809 = vmatprep.subr.mxu0 0.0
      %1810 = vmatpush1.msra.mxu0 0.0
      %1811 = vmatprep.subr.mxu0 0.0
      %1812 = vmatpush1.msra.mxu0 0.0
      %1813 = vmatprep.subr.mxu0 0.0
      %1814 = vmatpush1.msra.mxu0 0.0
      %1815 = vmatprep.subr.mxu0 0.0
      %1816 = vmatpush1.msra.mxu0 0.0
      %1817 = vmatprep.subr.mxu0 0.0
      %1818 = vmatpush1.msra.mxu0 0.0
      %1819 = vmatprep.subr.mxu0 0.0
      %1820 = vmatpush1.msra.mxu0 0.0
      %1821 = vmatprep.subr.mxu0 0.0
      %1822 = vmatpush1.msra.mxu0 0.0
      %1823 = vmatprep.subr.mxu0 0.0
      %1824 = vmatpush1.msra.mxu0 0.0
      %1825 = vmatprep.subr.mxu0 0.0
      %1826 = vmatpush1.msra.mxu0 0.0
      %1827 = vmatprep.subr.mxu0 0.0
      %1828 = vmatpush1.msra.mxu0 0.0
      %1829 = vmatprep.subr.mxu0 0.0
      %1830 = vmatpush1.msra.mxu0 0.0
      %1831 = vmatprep.subr.mxu0 0.0
      %1832 = vmatpush1.msra.mxu0 0.0
      %1833 = vmatprep.subr.mxu0 0.0
      %1834 = vmatpush1.msra.mxu0 0.0
      %1835 = vmatprep.subr.mxu0 0.0
      %1836 = vmatpush1.msra.mxu0 0.0
      %1837 = vmatprep.subr.mxu0 0.0
      %1838 = vmatpush1.msra.mxu0 0.0
      %1839 = vmatprep.subr.mxu0 0.0
      %1840 = vmatpush1.msra.mxu0 0.0
      %1841 = vmatprep.subr.mxu0 0.0
      %1842 = vmatpush1.msra.mxu0 0.0
      %1843 = vmatprep.subr.mxu0 0.0
      %1844 = vmatpush1.msra.mxu0 0.0
      %1845 = vmatprep.subr.mxu0 0.0
      %1846 = vmatpush1.msra.mxu0 0.0
      %1847 = vmatprep.subr.mxu0 0.0
      %1848 = vmatpush1.msra.mxu0 0.0
      %1849 = vmatprep.subr.mxu0 0.0
      %1850 = vmatpush1.msra.mxu0 0.0
      %1851 = vmatprep.subr.mxu0 0.0
      %1852 = vmatpush1.msra.mxu0 0.0
      %1853 = vmatprep.subr.mxu0 0.0
      %1854 = vmatpush1.msra.mxu0 0.0
      %1855 = vmatprep.mubr.f32.mxu0 0.0
      %1856 = vmatmul.mubr.f32.gmra.mrb[0].mxu0 %v1786
      %v1857 = vpop.f32.mrb[0].mxu0
      %v1858 = vadd.f32 %v1784, %v1857
      %v1859 = vpop.f32.mrb[0].mxu0
      %1860 = vmatprep.mubr.f32.mxu0 0.0
      %1861 = vmatmul.mubr.f32.gmra.mrb[0].mxu0 %v1789
      %v1862 = vpop.f32.mrb[0].mxu0
      %v1863 = vadd.f32 %v1784, %v1862
      %v1864 = vpop.f32.mrb[0].mxu0
      %1865 = vdwg.mxu0
      %v1866 = vmax.f32 %v1858, 0.0
      %v1867 = vmax.f32 %v1863, 0.0
      %v1868 = vld [vmem:[%s5 + $0x34] sm:$0xf]
      %v1869 = vunpack.c.l.bf16 %v1868
      %v1870 = vld [vmem:[%s4 + $0xd] sm:$0x1]
      %v1871 = vlaneseq
      %v1872 = vshrl.u32 %v1871, 7
      %v1873 = vsub.s32 0, %v1872
      %v1874 = vrot.slane %v1870, %v1873
      %v1876 = vsel %vm1202, %v1866, 0
      %v1879 = vsel %vm1202, %v1867, 0
      %1881 = vmatprep.subr.mxu0 0.0
      %1882 = vmatpush1.msra.mxu0 %v1869
      %1883 = vmatprep.subr.mxu0 0.0
      %1884 = vmatpush1.msra.mxu0 0.0
      %1885 = vmatprep.subr.mxu0 0.0
      %1886 = vmatpush1.msra.mxu0 0.0
      %1887 = vmatprep.subr.mxu0 0.0
      %1888 = vmatpush1.msra.mxu0 0.0
      %1889 = vmatprep.subr.mxu0 0.0
      %1890 = vmatpush1.msra.mxu0 0.0
      %1891 = vmatprep.subr.mxu0 0.0
      %1892 = vmatpush1.msra.mxu0 0.0
      %1893 = vmatprep.subr.mxu0 0.0
      %1894 = vmatpush1.msra.mxu0 0.0
      %1895 = vmatprep.subr.mxu0 0.0
      %1896 = vmatpush1.msra.mxu0 0.0
      %1897 = vmatprep.subr.mxu0 0.0
      %1898 = vmatpush1.msra.mxu0 0.0
      %1899 = vmatprep.subr.mxu0 0.0
      %1900 = vmatpush1.msra.mxu0 0.0
      %1901 = vmatprep.subr.mxu0 0.0
      %1902 = vmatpush1.msra.mxu0 0.0
      %1903 = vmatprep.subr.mxu0 0.0
      %1904 = vmatpush1.msra.mxu0 0.0
      %1905 = vmatprep.subr.mxu0 0.0
      %1906 = vmatpush1.msra.mxu0 0.0
      %1907 = vmatprep.subr.mxu0 0.0
      %1908 = vmatpush1.msra.mxu0 0.0
      %1909 = vmatprep.subr.mxu0 0.0
      %1910 = vmatpush1.msra.mxu0 0.0
      %1911 = vmatprep.subr.mxu0 0.0
      %1912 = vmatpush1.msra.mxu0 0.0
      %1913 = vmatprep.subr.mxu0 0.0
      %1914 = vmatpush1.msra.mxu0 0.0
      %1915 = vmatprep.subr.mxu0 0.0
      %1916 = vmatpush1.msra.mxu0 0.0
      %1917 = vmatprep.subr.mxu0 0.0
      %1918 = vmatpush1.msra.mxu0 0.0
      %1919 = vmatprep.subr.mxu0 0.0
      %1920 = vmatpush1.msra.mxu0 0.0
      %1921 = vmatprep.subr.mxu0 0.0
      %1922 = vmatpush1.msra.mxu0 0.0
      %1923 = vmatprep.subr.mxu0 0.0
      %1924 = vmatpush1.msra.mxu0 0.0
      %1925 = vmatprep.subr.mxu0 0.0
      %1926 = vmatpush1.msra.mxu0 0.0
      %1927 = vmatprep.subr.mxu0 0.0
      %1928 = vmatpush1.msra.mxu0 0.0
      %1929 = vmatprep.subr.mxu0 0.0
      %1930 = vmatpush1.msra.mxu0 0.0
      %1931 = vmatprep.subr.mxu0 0.0
      %1932 = vmatpush1.msra.mxu0 0.0
      %1933 = vmatprep.subr.mxu0 0.0
      %1934 = vmatpush1.msra.mxu0 0.0
      %1935 = vmatprep.subr.mxu0 0.0
      %1936 = vmatpush1.msra.mxu0 0.0
      %1937 = vmatprep.subr.mxu0 0.0
      %1938 = vmatpush1.msra.mxu0 0.0
      %1939 = vmatprep.subr.mxu0 0.0
      %1940 = vmatpush1.msra.mxu0 0.0
      %1941 = vmatprep.subr.mxu0 0.0
      %1942 = vmatpush1.msra.mxu0 0.0
      %1943 = vmatprep.subr.mxu0 0.0
      %1944 = vmatpush1.msra.mxu0 0.0
      %1945 = vmatprep.mubr.f32.mxu0 0.0
      %1946 = vmatmul.mubr.f32.gmra.mrb[0].mxu0 %v1876
      %v1947 = vpop.f32.mrb[0].mxu0
      %v1948 = vadd.f32 %v1874, %v1947
      %v1949 = vpop.f32.mrb[0].mxu0
      %1950 = vmatprep.mubr.f32.mxu0 0.0
      %1951 = vmatmul.mubr.f32.gmra.mrb[0].mxu0 %v1879
      %v1952 = vpop.f32.mrb[0].mxu0
      %v1953 = vadd.f32 %v1874, %v1952
      %v1954 = vpop.f32.mrb[0].mxu0
      %1955 = vdwg.mxu0
      %v1956 = vmax.f32 %v1948, 0.0
      %v1957 = vmax.f32 %v1953, 0.0
      %1959 = vrot.lane.b32.xlu0 %v1696, 8
      %v1960 = vpop.permute.xlu0 %1959
      %1961 = vrot.lane.b32.xlu0 %v1697, 8
      %v1962 = vpop.permute.xlu0 %1961
      %1967 = vrot.lane.b32.xlu0 %v1956, 16
      %v1968 = vpop.permute.xlu0 %1967
      %1969 = vrot.lane.b32.xlu0 %v1957, 16
      %v1970 = vpop.permute.xlu0 %1969
      %v1973 = vsel %vm1202, %v1430, %v1960
      %v1974 = vsel %vm1202, %v1431, %v1962
      %v1975 = vsel %vm409, %v1973, %v1968
      %v1976 = vsel %vm409, %v1974, %v1970
      %v1977 = vld [vmem:[%s5 + $0x38] sm:$0xf]
      %v1978 = vld [vmem:[%s5 + $0x3c] sm:$0xf]
      %v1979 = vld [vmem:[%s5 + $0x40] sm:$0xf]
      %v1980 = vld [vmem:[%s5 + $0x44] sm:$0xf]
      %v1981 = vld [vmem:[%s5 + $0x48] sm:$0xf]
      %v1982 = vld [vmem:[%s5 + $0x4c] sm:$0xf]
      %v1983 = vunpack.c.l.bf16 %v1977
      %v1984 = vunpack.c.l.bf16 %v1978
      %v1985 = vunpack.c.l.bf16 %v1979
      %v1986 = vunpack.c.l.bf16 %v1980
      %v1987 = vunpack.c.l.bf16 %v1981
      %v1988 = vunpack.c.l.bf16 %v1982
      %v1989 = vld [vmem:[%s5 + $0x50] sm:$0xf]
      %v1990 = vld [vmem:[%s5 + $0x54] sm:$0xf]
      %v1991 = vld [vmem:[%s5 + $0x58] sm:$0xf]
      %v1992 = vunpack.c.l.bf16 %v1989
      %v1993 = vunpack.c.l.bf16 %v1990
      %v1994 = vunpack.c.l.bf16 %v1991
      %vm1995 = vcmask 195584
      %v1997 = vsel %vm1995, %v1975, 0
      %v2000 = vsel %vm1995, %v1976, 0
      %2002 = vmatprep.subr.mxu0 0.0
      %2003 = vmatpush1.msra.mxu0 %v1992
      %2004 = vmatprep.subr.mxu0 0.0
      %2005 = vmatpush1.msra.mxu0 %v1993
      %2006 = vmatprep.subr.mxu0 0.0
      %2007 = vmatpush1.msra.mxu0 %v1994
      %2008 = vmatprep.subr.mxu0 0.0
      %2009 = vmatpush1.msra.mxu0 0.0
      %2010 = vmatprep.subr.mxu0 0.0
      %2011 = vmatpush1.msra.mxu0 0.0
      %2012 = vmatprep.subr.mxu0 0.0
      %2013 = vmatpush1.msra.mxu0 0.0
      %2014 = vmatprep.subr.mxu0 0.0
      %2015 = vmatpush1.msra.mxu0 0.0
      %2016 = vmatprep.subr.mxu0 0.0
      %2017 = vmatpush1.msra.mxu0 0.0
      %2018 = vmatprep.subr.mxu0 0.0
      %2019 = vmatpush1.msra.mxu0 0.0
      %2020 = vmatprep.subr.mxu0 0.0
      %2021 = vmatpush1.msra.mxu0 0.0
      %2022 = vmatprep.subr.mxu0 0.0
      %2023 = vmatpush1.msra.mxu0 0.0
      %2024 = vmatprep.subr.mxu0 0.0
      %2025 = vmatpush1.msra.mxu0 0.0
      %2026 = vmatprep.subr.mxu0 0.0
      %2027 = vmatpush1.msra.mxu0 0.0
      %2028 = vmatprep.subr.mxu0 0.0
      %2029 = vmatpush1.msra.mxu0 0.0
      %2030 = vmatprep.subr.mxu0 0.0
      %2031 = vmatpush1.msra.mxu0 0.0
      %2032 = vmatprep.subr.mxu0 0.0
      %2033 = vmatpush1.msra.mxu0 0.0
      %2034 = vmatprep.subr.mxu0 0.0
      %2035 = vmatpush1.msra.mxu0 0.0
      %2036 = vmatprep.subr.mxu0 0.0
      %2037 = vmatpush1.msra.mxu0 0.0
      %2038 = vmatprep.subr.mxu0 0.0
      %2039 = vmatpush1.msra.mxu0 0.0
      %2040 = vmatprep.subr.mxu0 0.0
      %2041 = vmatpush1.msra.mxu0 0.0
      %2042 = vmatprep.subr.mxu0 0.0
      %2043 = vmatpush1.msra.mxu0 0.0
      %2044 = vmatprep.subr.mxu0 0.0
      %2045 = vmatpush1.msra.mxu0 0.0
      %2046 = vmatprep.subr.mxu0 0.0
      %2047 = vmatpush1.msra.mxu0 0.0
      %2048 = vmatprep.subr.mxu0 0.0
      %2049 = vmatpush1.msra.mxu0 0.0
      %2050 = vmatprep.subr.mxu0 0.0
      %2051 = vmatpush1.msra.mxu0 0.0
      %2052 = vmatprep.subr.mxu0 0.0
      %2053 = vmatpush1.msra.mxu0 0.0
      %2054 = vmatprep.subr.mxu0 0.0
      %2055 = vmatpush1.msra.mxu0 0.0
      %2056 = vmatprep.subr.mxu0 0.0
      %2057 = vmatpush1.msra.mxu0 0.0
      %2058 = vmatprep.subr.mxu0 0.0
      %2059 = vmatpush1.msra.mxu0 0.0
      %2060 = vmatprep.subr.mxu0 0.0
      %2061 = vmatpush1.msra.mxu0 0.0
      %2062 = vmatprep.subr.mxu0 0.0
      %2063 = vmatpush1.msra.mxu0 0.0
      %2064 = vmatprep.subr.mxu0 0.0
      %2065 = vmatpush1.msra.mxu0 0.0
      %2066 = vmatprep.mubr.f32.mxu0 0.0
      %2067 = vmatmul.mubr.f32.gmra.mrb[0].mxu0 %v1997
      %v2068 = vpop.f32.mrb[0].mxu0
      %v2069 = vadd.f32 0.0, %v2068
      %v2070 = vpop.f32.mrb[0].mxu0
      %2071 = vmatprep.mubr.f32.mxu0 0.0
      %2072 = vmatmul.mubr.f32.gmra.mrb[0].mxu0 %v2000
      %v2073 = vpop.f32.mrb[0].mxu0
      %v2074 = vadd.f32 0.0, %v2073
      %v2075 = vpop.f32.mrb[0].mxu0
      %2076 = vdwg.mxu0
      %vm2077 = vcmask 392192
      %v2079 = vsel %vm2077, %v1195, 0
      %v2082 = vsel %vm2077, %v1196, 0
      %2084 = vmatprep.subr.mxu0 0.0
      %2085 = vmatpush1.msra.mxu0 %v1983
      %2086 = vmatprep.subr.mxu0 0.0
      %2087 = vmatpush1.msra.mxu0 %v1984
      %2088 = vmatprep.subr.mxu0 0.0
      %2089 = vmatpush1.msra.mxu0 %v1985
      %2090 = vmatprep.subr.mxu0 0.0
      %2091 = vmatpush1.msra.mxu0 %v1986
      %2092 = vmatprep.subr.mxu0 0.0
      %2093 = vmatpush1.msra.mxu0 %v1987
      %2094 = vmatprep.subr.mxu0 0.0
      %2095 = vmatpush1.msra.mxu0 %v1988
      %2096 = vmatprep.subr.mxu0 0.0
      %2097 = vmatpush1.msra.mxu0 0.0
      %2098 = vmatprep.subr.mxu0 0.0
      %2099 = vmatpush1.msra.mxu0 0.0
      %2100 = vmatprep.subr.mxu0 0.0
      %2101 = vmatpush1.msra.mxu0 0.0
      %2102 = vmatprep.subr.mxu0 0.0
      %2103 = vmatpush1.msra.mxu0 0.0
      %2104 = vmatprep.subr.mxu0 0.0
      %2105 = vmatpush1.msra.mxu0 0.0
      %2106 = vmatprep.subr.mxu0 0.0
      %2107 = vmatpush1.msra.mxu0 0.0
      %2108 = vmatprep.subr.mxu0 0.0
      %2109 = vmatpush1.msra.mxu0 0.0
      %2110 = vmatprep.subr.mxu0 0.0
      %2111 = vmatpush1.msra.mxu0 0.0
      %2112 = vmatprep.subr.mxu0 0.0
      %2113 = vmatpush1.msra.mxu0 0.0
      %2114 = vmatprep.subr.mxu0 0.0
      %2115 = vmatpush1.msra.mxu0 0.0
      %2116 = vmatprep.subr.mxu0 0.0
      %2117 = vmatpush1.msra.mxu0 0.0
      %2118 = vmatprep.subr.mxu0 0.0
      %2119 = vmatpush1.msra.mxu0 0.0
      %2120 = vmatprep.subr.mxu0 0.0
      %2121 = vmatpush1.msra.mxu0 0.0
      %2122 = vmatprep.subr.mxu0 0.0
      %2123 = vmatpush1.msra.mxu0 0.0
      %2124 = vmatprep.subr.mxu0 0.0
      %2125 = vmatpush1.msra.mxu0 0.0
      %2126 = vmatprep.subr.mxu0 0.0
      %2127 = vmatpush1.msra.mxu0 0.0
      %2128 = vmatprep.subr.mxu0 0.0
      %2129 = vmatpush1.msra.mxu0 0.0
      %2130 = vmatprep.subr.mxu0 0.0
      %2131 = vmatpush1.msra.mxu0 0.0
      %2132 = vmatprep.subr.mxu0 0.0
      %2133 = vmatpush1.msra.mxu0 0.0
      %2134 = vmatprep.subr.mxu0 0.0
      %2135 = vmatpush1.msra.mxu0 0.0
      %2136 = vmatprep.subr.mxu0 0.0
      %2137 = vmatpush1.msra.mxu0 0.0
      %2138 = vmatprep.subr.mxu0 0.0
      %2139 = vmatpush1.msra.mxu0 0.0
      %2140 = vmatprep.subr.mxu0 0.0
      %2141 = vmatpush1.msra.mxu0 0.0
      %2142 = vmatprep.subr.mxu0 0.0
      %2143 = vmatpush1.msra.mxu0 0.0
      %2144 = vmatprep.subr.mxu0 0.0
      %2145 = vmatpush1.msra.mxu0 0.0
      %2146 = vmatprep.subr.mxu0 0.0
      %2147 = vmatpush1.msra.mxu0 0.0
      %2148 = vmatprep.mubr.f32.mxu0 0.0
      %2149 = vmatmul.mubr.f32.gmra.mrb[0].mxu0 %v2079
      %v2150 = vpop.f32.mrb[0].mxu0
      %v2151 = vadd.f32 %v2069, %v2150
      %v2152 = vpop.f32.mrb[0].mxu0
      %2153 = vmatprep.mubr.f32.mxu0 0.0
      %2154 = vmatmul.mubr.f32.gmra.mrb[0].mxu0 %v2082
      %v2155 = vpop.f32.mrb[0].mxu0
      %v2156 = vadd.f32 %v2074, %v2155
      %v2157 = vpop.f32.mrb[0].mxu0
      %2158 = vdwg.mxu0
      %v2159 = vld [vmem:[%s4 + $0xe] sm:$0x1]
      %v2160 = vlaneseq
      %v2161 = vshrl.u32 %v2160, 7
      %v2162 = vsub.s32 0, %v2161
      %v2163 = vrot.slane %v2159, %v2162
      %v2165 = vsel %vm513, %v317, 0
      %v2168 = vsel %vm543, %v2156, 0
      %2170 = vmatprep.subr.mxu0 0.0
      %2171 = vmatpush1.msra.mxu0 %v2151
      %2172 = vmatprep.subr.mxu0 0.0
      %2173 = vmatpush1.msra.mxu0 %v2168
      %2174 = vmatprep.subr.mxu0 0.0
      %2175 = vmatpush1.msra.mxu0 0.0
      %2176 = vmatprep.subr.mxu0 0.0
      %2177 = vmatpush1.msra.mxu0 0.0
      %2178 = vmatprep.subr.mxu0 0.0
      %2179 = vmatpush1.msra.mxu0 0.0
      %2180 = vmatprep.subr.mxu0 0.0
      %2181 = vmatpush1.msra.mxu0 0.0
      %2182 = vmatprep.subr.mxu0 0.0
      %2183 = vmatpush1.msra.mxu0 0.0
      %2184 = vmatprep.subr.mxu0 0.0
      %2185 = vmatpush1.msra.mxu0 0.0
      %2186 = vmatprep.subr.mxu0 0.0
      %2187 = vmatpush1.msra.mxu0 0.0
      %2188 = vmatprep.subr.mxu0 0.0
      %2189 = vmatpush1.msra.mxu0 0.0
      %2190 = vmatprep.subr.mxu0 0.0
      %2191 = vmatpush1.msra.mxu0 0.0
      %2192 = vmatprep.subr.mxu0 0.0
      %2193 = vmatpush1.msra.mxu0 0.0
      %2194 = vmatprep.subr.mxu0 0.0
      %2195 = vmatpush1.msra.mxu0 0.0
      %2196 = vmatprep.subr.mxu0 0.0
      %2197 = vmatpush1.msra.mxu0 0.0
      %2198 = vmatprep.subr.mxu0 0.0
      %2199 = vmatpush1.msra.mxu0 0.0
      %2200 = vmatprep.subr.mxu0 0.0
      %2201 = vmatpush1.msra.mxu0 0.0
      %2202 = vmatprep.subr.mxu0 0.0
      %2203 = vmatpush1.msra.mxu0 0.0
      %2204 = vmatprep.subr.mxu0 0.0
      %2205 = vmatpush1.msra.mxu0 0.0
      %2206 = vmatprep.subr.mxu0 0.0
      %2207 = vmatpush1.msra.mxu0 0.0
      %2208 = vmatprep.subr.mxu0 0.0
      %2209 = vmatpush1.msra.mxu0 0.0
      %2210 = vmatprep.subr.mxu0 0.0
      %2211 = vmatpush1.msra.mxu0 0.0
      %2212 = vmatprep.subr.mxu0 0.0
      %2213 = vmatpush1.msra.mxu0 0.0
      %2214 = vmatprep.subr.mxu0 0.0
      %2215 = vmatpush1.msra.mxu0 0.0
      %2216 = vmatprep.subr.mxu0 0.0
      %2217 = vmatpush1.msra.mxu0 0.0
      %2218 = vmatprep.subr.mxu0 0.0
      %2219 = vmatpush1.msra.mxu0 0.0
      %2220 = vmatprep.subr.mxu0 0.0
      %2221 = vmatpush1.msra.mxu0 0.0
      %2222 = vmatprep.subr.mxu0 0.0
      %2223 = vmatpush1.msra.mxu0 0.0
      %2224 = vmatprep.subr.mxu0 0.0
      %2225 = vmatpush1.msra.mxu0 0.0
      %2226 = vmatprep.subr.mxu0 0.0
      %2227 = vmatpush1.msra.mxu0 0.0
      %2228 = vmatprep.subr.mxu0 0.0
      %2229 = vmatpush1.msra.mxu0 0.0
      %2230 = vmatprep.subr.mxu0 0.0
      %2231 = vmatpush1.msra.mxu0 0.0
      %2232 = vmatprep.subr.mxu0 0.0
      %2233 = vmatpush1.msra.mxu0 0.0
      %2234 = vmatprep.mubr.f32.mxu0 0.0
      %2235 = vmatmul.mubr.f32.gmra.mrb[0].mxu0 %v2165
      %v2236 = vpop.f32.mrb[0].mxu0
      %v2237 = vadd.f32 %v2163, %v2236
      %v2238 = vpop.f32.mrb[0].mxu0
      %2239 = vdwg.mxu0
      %v2240 = vld [vmem:[%s5 + $0x5c] sm:$0xf]
      %v2241 = vld [vmem:[%s5 + $0x60] sm:$0xf]
      %v2242 = vld [vmem:[%s5 + $0x64] sm:$0xf]
      %v2243 = vld [vmem:[%s5 + $0x68] sm:$0xf]
      %v2244 = vunpack.c.l.bf16 %v2240
      %v2245 = vunpack.c.l.bf16 %v2241
      %v2246 = vunpack.c.l.bf16 %v2242
      %v2247 = vunpack.c.l.bf16 %v2243
      %v2248 = vld [vmem:[%s4 + $0xf] sm:$0x1]
      %v2249 = vlaneseq
      %v2250 = vshrl.u32 %v2249, 7
      %v2251 = vsub.s32 0, %v2250
      %v2252 = vrot.slane %v2248, %v2251
      %v2254 = vsel %vm1194, %v2237, 0
      %2256 = vmatprep.subr.mxu0 0.0
      %2257 = vmatpush1.msra.mxu0 %v2244
      %2258 = vmatprep.subr.mxu0 0.0
      %2259 = vmatpush1.msra.mxu0 %v2245
      %2260 = vmatprep.subr.mxu0 0.0
      %2261 = vmatpush1.msra.mxu0 %v2246
      %2262 = vmatprep.subr.mxu0 0.0
      %2263 = vmatpush1.msra.mxu0 %v2247
      %2264 = vmatprep.subr.mxu0 0.0
      %2265 = vmatpush1.msra.mxu0 0.0
      %2266 = vmatprep.subr.mxu0 0.0
      %2267 = vmatpush1.msra.mxu0 0.0
      %2268 = vmatprep.subr.mxu0 0.0
      %2269 = vmatpush1.msra.mxu0 0.0
      %2270 = vmatprep.subr.mxu0 0.0
      %2271 = vmatpush1.msra.mxu0 0.0
      %2272 = vmatprep.subr.mxu0 0.0
      %2273 = vmatpush1.msra.mxu0 0.0
      %2274 = vmatprep.subr.mxu0 0.0
      %2275 = vmatpush1.msra.mxu0 0.0
      %2276 = vmatprep.subr.mxu0 0.0
      %2277 = vmatpush1.msra.mxu0 0.0
      %2278 = vmatprep.subr.mxu0 0.0
      %2279 = vmatpush1.msra.mxu0 0.0
      %2280 = vmatprep.subr.mxu0 0.0
      %2281 = vmatpush1.msra.mxu0 0.0
      %2282 = vmatprep.subr.mxu0 0.0
      %2283 = vmatpush1.msra.mxu0 0.0
      %2284 = vmatprep.subr.mxu0 0.0
      %2285 = vmatpush1.msra.mxu0 0.0
      %2286 = vmatprep.subr.mxu0 0.0
      %2287 = vmatpush1.msra.mxu0 0.0
      %2288 = vmatprep.subr.mxu0 0.0
      %2289 = vmatpush1.msra.mxu0 0.0
      %2290 = vmatprep.subr.mxu0 0.0
      %2291 = vmatpush1.msra.mxu0 0.0
      %2292 = vmatprep.subr.mxu0 0.0
      %2293 = vmatpush1.msra.mxu0 0.0
      %2294 = vmatprep.subr.mxu0 0.0
      %2295 = vmatpush1.msra.mxu0 0.0
      %2296 = vmatprep.subr.mxu0 0.0
      %2297 = vmatpush1.msra.mxu0 0.0
      %2298 = vmatprep.subr.mxu0 0.0
      %2299 = vmatpush1.msra.mxu0 0.0
      %2300 = vmatprep.subr.mxu0 0.0
      %2301 = vmatpush1.msra.mxu0 0.0
      %2302 = vmatprep.subr.mxu0 0.0
      %2303 = vmatpush1.msra.mxu0 0.0
      %2304 = vmatprep.subr.mxu0 0.0
      %2305 = vmatpush1.msra.mxu0 0.0
      %2306 = vmatprep.subr.mxu0 0.0
      %2307 = vmatpush1.msra.mxu0 0.0
      %2308 = vmatprep.subr.mxu0 0.0
      %2309 = vmatpush1.msra.mxu0 0.0
      %2310 = vmatprep.subr.mxu0 0.0
      %2311 = vmatpush1.msra.mxu0 0.0
      %2312 = vmatprep.subr.mxu0 0.0
      %2313 = vmatpush1.msra.mxu0 0.0
      %2314 = vmatprep.subr.mxu0 0.0
      %2315 = vmatpush1.msra.mxu0 0.0
      %2316 = vmatprep.subr.mxu0 0.0
      %2317 = vmatpush1.msra.mxu0 0.0
      %2318 = vmatprep.subr.mxu0 0.0
      %2319 = vmatpush1.msra.mxu0 0.0
      %2320 = vmatprep.mubr.f32.mxu0 0.0
      %2321 = vmatmul.mubr.f32.gmra.mrb[0].mxu0 %v2254
      %v2322 = vpop.f32.mrb[0].mxu0
      %v2323 = vadd.f32 %v2252, %v2322
      %v2324 = vpop.f32.mrb[0].mxu0
      %2325 = vdwg.mxu0
      %v2326 = vmax.f32 %v2323, 0.0
      %v2327 = vld [vmem:[%s5 + $0x6c] sm:$0xf]
      %v2328 = vld [vmem:[%s5 + $0x70] sm:$0xf]
      %v2329 = vld [vmem:[%s5 + $0x74] sm:$0xf]
      %v2330 = vunpack.c.l.bf16 %v2327
      %v2331 = vunpack.c.l.bf16 %v2328
      %v2332 = vunpack.c.l.bf16 %v2329
      %v2333 = vld [vmem:[%s4 + $0x10] sm:$0x1]
      %v2334 = vlaneseq
      %v2335 = vshrl.u32 %v2334, 7
      %v2336 = vsub.s32 0, %v2335
      %v2337 = vrot.slane %v2333, %v2336
      %v2339 = vsel %vm1995, %v2326, 0
      %2341 = vmatprep.subr.mxu0 0.0
      %2342 = vmatpush1.msra.mxu0 %v2330
      %2343 = vmatprep.subr.mxu0 0.0
      %2344 = vmatpush1.msra.mxu0 %v2331
      %2345 = vmatprep.subr.mxu0 0.0
      %2346 = vmatpush1.msra.mxu0 %v2332
      %2347 = vmatprep.subr.mxu0 0.0
      %2348 = vmatpush1.msra.mxu0 0.0
      %2349 = vmatprep.subr.mxu0 0.0
      %2350 = vmatpush1.msra.mxu0 0.0
      %2351 = vmatprep.subr.mxu0 0.0
      %2352 = vmatpush1.msra.mxu0 0.0
      %2353 = vmatprep.subr.mxu0 0.0
      %2354 = vmatpush1.msra.mxu0 0.0
      %2355 = vmatprep.subr.mxu0 0.0
      %2356 = vmatpush1.msra.mxu0 0.0
      %2357 = vmatprep.subr.mxu0 0.0
      %2358 = vmatpush1.msra.mxu0 0.0
      %2359 = vmatprep.subr.mxu0 0.0
      %2360 = vmatpush1.msra.mxu0 0.0
      %2361 = vmatprep.subr.mxu0 0.0
      %2362 = vmatpush1.msra.mxu0 0.0
      %2363 = vmatprep.subr.mxu0 0.0
      %2364 = vmatpush1.msra.mxu0 0.0
      %2365 = vmatprep.subr.mxu0 0.0
      %2366 = vmatpush1.msra.mxu0 0.0
      %2367 = vmatprep.subr.mxu0 0.0
      %2368 = vmatpush1.msra.mxu0 0.0
      %2369 = vmatprep.subr.mxu0 0.0
      %2370 = vmatpush1.msra.mxu0 0.0
      %2371 = vmatprep.subr.mxu0 0.0
      %2372 = vmatpush1.msra.mxu0 0.0
      %2373 = vmatprep.subr.mxu0 0.0
      %2374 = vmatpush1.msra.mxu0 0.0
      %2375 = vmatprep.subr.mxu0 0.0
      %2376 = vmatpush1.msra.mxu0 0.0
      %2377 = vmatprep.subr.mxu0 0.0
      %2378 = vmatpush1.msra.mxu0 0.0
      %2379 = vmatprep.subr.mxu0 0.0
      %2380 = vmatpush1.msra.mxu0 0.0
      %2381 = vmatprep.subr.mxu0 0.0
      %2382 = vmatpush1.msra.mxu0 0.0
      %2383 = vmatprep.subr.mxu0 0.0
      %2384 = vmatpush1.msra.mxu0 0.0
      %2385 = vmatprep.subr.mxu0 0.0
      %2386 = vmatpush1.msra.mxu0 0.0
      %2387 = vmatprep.subr.mxu0 0.0
      %2388 = vmatpush1.msra.mxu0 0.0
      %2389 = vmatprep.subr.mxu0 0.0
      %2390 = vmatpush1.msra.mxu0 0.0
      %2391 = vmatprep.subr.mxu0 0.0
      %2392 = vmatpush1.msra.mxu0 0.0
      %2393 = vmatprep.subr.mxu0 0.0
      %2394 = vmatpush1.msra.mxu0 0.0
      %2395 = vmatprep.subr.mxu0 0.0
      %2396 = vmatpush1.msra.mxu0 0.0
      %2397 = vmatprep.subr.mxu0 0.0
      %2398 = vmatpush1.msra.mxu0 0.0
      %2399 = vmatprep.subr.mxu0 0.0
      %2400 = vmatpush1.msra.mxu0 0.0
      %2401 = vmatprep.subr.mxu0 0.0
      %2402 = vmatpush1.msra.mxu0 0.0
      %2403 = vmatprep.subr.mxu0 0.0
      %2404 = vmatpush1.msra.mxu0 0.0
      %2405 = vmatprep.mubr.f32.mxu0 0.0
      %2406 = vmatmul.mubr.f32.gmra.mrb[0].mxu0 %v2339
      %v2407 = vpop.f32.mrb[0].mxu0
      %v2408 = vadd.f32 %v2337, %v2407
      %v2409 = vpop.f32.mrb[0].mxu0
      %2410 = vdwg.mxu0
      %2411 = vst [vmem:[%s303] sm:$0x3] %v2408
      %p2412 = scmp.lt.s32.totalorder %s17, 7
      %s2413 = scalar_select %p2412, %s17, 7
      %s2414 = smul.addr %s2413, 2
      %s2415 = scalar_lea.vmem %s6, %s2414
      // Predicated region
      $region45: #{multignn_fused.1} parent=43 // pred_check
        %p2416 = pneg %p181
      $region46: #{multignn_fused.1} parent=43 // pred_check_branch
        %2418 = sbr.rel (%p2416) target = $region48
      $region47: #{multignn_fused.1} parent=43 // pred_region
        _
      $region48: #{multignn_fused.1} parent=43 // pred_fallthru
        _
    $region44: #{multignn_fused.1} parent=5 // pred_fallthru
      _
    %p2419 = scmp.le.s32.totalorder 2, %s12
    // Predicated region
    $region49: #{multignn_fused.1} parent=5 // pred_check
      %p2420 = pneg %p2419
    $region50: #{multignn_fused.1} parent=5 // pred_check_branch
      %2422 = sbr.rel (%p2420) target = $region52
    $region51: #{multignn_fused.1} parent=5 // pred_region
      %s2423 = ssub.s32 %s12, 2
      // Predicated region
      $region53: #{multignn_fused.1} parent=51 // pred_check
        %p2424 = pneg %p187
      $region54: #{multignn_fused.1} parent=51 // pred_check_branch
        %2426 = sbr.rel (%p2424) target = $region56
      $region55: #{multignn_fused.1} parent=51 // pred_region
        %p2427 = scmp.lt.s32.totalorder %s18, 7
        %s2428 = scalar_select %p2427, %s18, 7
        %s2429 = smul.addr %s2428, 2
        %s2430 = scalar_lea.vmem %s6, %s2429
      $region56: #{multignn_fused.1} parent=51 // pred_fallthru
        _
    $region52: #{multignn_fused.1} parent=5 // pred_fallthru
      _
  $region6: #{multignn_fused.1} parent=0 // loop_footer
    %s16 = sadd.s32 1, %s12
  $region7: #{multignn_fused.1} parent=0 // loop_footer_branch
    %11 = sbr.rel target = $region3
  $region8: #{multignn_fused.1} parent=0 // loop_exit
    _

</llo_original>
